<compile_context>
chip_gen: v7x
topology: tpu7x:2x2x1
jax: 0.10.0
libtpu: 0.0.40
codegen_flags: <defaults>
</compile_context>

<pallas_src>
import jax
import jax.numpy as jnp
from jax import lax
from jax.experimental import pallas as pl
from jax.experimental.pallas import tpu as pltpu


def _round_up(x, m):
    return (x + m - 1) // m * m


def _device_config():
    """Per-generation knobs: softmax elementwise dtype, VMEM limit, tile prefs."""
    try:
        kind = jax.devices()[0].device_kind.lower()
    except Exception:
        kind = ""
    is_v7x = ("7x" in kind) or ("v7" in kind)
    is_v6 = "v6" in kind
    # bf16 VALU / bf16 EUP exist on v6e and v7x only; on v5e (and unknown
    # backends) keep the N^2 elementwise softmax math in f32.
    softmax_dtype = jnp.bfloat16 if (is_v6 or is_v7x) else jnp.float32
    # v7x: 64 MiB physical VMEM per TC -> cap at 48 MiB.  v5e/v6e: raise the
    # small default scoped limit (16/32 MiB) explicitly.
    vmem_limit = (48 << 20) if is_v7x else (64 << 20)
    tq_prefs = (256, 128)          # multiples of 128 (v5e MXU) and 256 (v6e/v7x)
    tk_prefs = (512, 256, 128)
    return softmax_dtype, vmem_limit, tq_prefs, tk_prefs


def _pick_tile(n, prefs):
    for t in prefs:
        if t <= n and n % t == 0:
            return t
    return n   # fall back to the full axis (allowed by the (8,128) rule)


def _cross_attn_kernel(x1_ref, x2_ref, wq_ref, bq_ref, wkv_ref, bkv_ref, o_ref,
                       q_sc, m_sc, acc_sc):
    """Flash-style spatial cross attention on channel-major (C, lanes) tiles.

    Grid = (batch, q-tile, kv-tile); kv is the innermost ("arbitrary") axis.
      x1_ref  : (1, C, tq)   query-side activations (lanes = spatial positions)
      x2_ref  : (1, C, tk)   key/value-side activations
      wq_ref  : (Cp, C)      Q conv1x1 weight, zero-padded to Cp=round_up(C,8),
                             1/sqrt(N) pre-folded
      bq_ref  : (Cp, 1)      Q bias (padded, scaled)
      wkv_ref : (Cp+Cv, C)   fused [Wk ; 0pad ; Wv ; denom-row(w=0) ; 0pad]
      bkv_ref : (Cp+Cv, 1)   fused [bk ; 0    ; bv ; 1.0            ; 0   ]
      o_ref   : (1, C, tq)   normalized context (written on the last kv step)
      q_sc    : (Cp, tq)     Q tile, persists across kv steps (softmax dtype)
      m_sc    : (1, tq)      running max (f32)
      acc_sc  : (Cv, tq)     running [ctx ; denominator] accumulator (f32)
    """
    ki = pl.program_id(2)
    n_kv = pl.num_programs(2)
    c = o_ref.shape[1]
    cp = wq_ref.shape[0]
    sm_dtype = q_sc.dtype

    @pl.when(ki == 0)
    def _():
        m_sc[...] = jnp.full_like(m_sc, -jnp.inf)
        acc_sc[...] = jnp.zeros_like(acc_sc)
        # Q projection only once per (batch, q-tile); 1/sqrt(N) already folded.
        q = jnp.dot(wq_ref[...], x1_ref[0],
                    preferred_element_type=jnp.float32) + bq_ref[...]
        q_sc[...] = q.astype(sm_dtype)

    # Fused K/V projection (one matmul).  The extra denominator row has zero
    # weight and bias 1.0, so the context matmul below also accumulates the
    # softmax row-sums for free (rides along under the same online rescale).
    kv = jnp.dot(wkv_ref[...], x2_ref[0],
                 preferred_element_type=jnp.float32) + bkv_ref[...]
    k = kv[:cp, :]            # (Cp, tk)  8-aligned slice -> free view
    v1 = kv[cp:, :]           # (Cv, tk)  8-aligned slice -> free view

    # Scores, TRANSPOSED orientation: s[j, i] = sum_c k[c, j] * q[c, i].
    # The transposed operand is the tiny (Cp, tk) k tile, and the big context
    # matmul below becomes canonical (no N x N transpose).  On v6e/v7x
    # sm_dtype == bf16 -> scores come out of the MXU in bf16 and the N^2
    # subtract/exp run on the bf16 VALU/EUP.
    s = lax.dot_general(k.astype(sm_dtype), q_sc[...],
                        dimension_numbers=(((0,), (0,)), ((), ())),
                        preferred_element_type=sm_dtype)            # (tk, tq)

    # Online (flash) softmax: running max + rescale of the accumulator.
    m_prev = m_sc[...]                                              # (1, tq) f32
    m_tile = jnp.max(s, axis=0, keepdims=True).astype(jnp.float32)  # (1, tq)
    m_new = jnp.maximum(m_prev, m_tile)
    alpha = jnp.exp(m_prev - m_new)                                 # (1, tq) f32
    # bf16 cast fused into the exp: the f32 (tk, tq) e buffer never materializes.
    e = jnp.exp(s - m_new.astype(sm_dtype)).astype(jnp.bfloat16)    # (tk, tq)

    # Context (+ denominator row) update: canonical matmul, bf16 in / f32 acc.
    ctx_upd = lax.dot_general(v1.astype(jnp.bfloat16), e,
                              dimension_numbers=(((1,), (0,)), ((), ())),
                              preferred_element_type=jnp.float32)   # (Cv, tq)
    acc_sc[...] = alpha * acc_sc[...] + ctx_upd
    m_sc[...] = m_new

    @pl.when(ki == n_kv - 1)
    def _():
        acc = acc_sc[...]
        # Row `c` of the accumulator is the softmax denominator (ones-row trick).
        inv_l = pl.reciprocal(acc[c:c + 1, :], approx=True)         # (1, tq) EUP
        o_ref[0] = (acc[:c, :] * inv_l).astype(o_ref.dtype)         # lane-dense


@jax.jit
def cross_attention_block(x1, x2, wq, bq, wk, bk, wv, bv):
    """x1, x2: (B, C, H, W) f32.  wq/wk/wv: (C, C) conv1x1 weights (C_out, C_in).
    bq/bk/bv: (C,).  Returns (B, C, H, W) matching the PyTorch module."""
    B, C, H, W = x1.shape
    N = H * W
    Cp = _round_up(C, 8)            # K / Q row padding (f32 sublane tile)
    Cv = _round_up(C + 1, 8)        # V rows + denominator row

    sm_dtype, vmem_limit, tq_prefs, tk_prefs = _device_config()
    tq = _pick_tile(N, tq_prefs)
    tk = _pick_tile(N, tk_prefs)

    # Channel-major views: raw reshapes only, no input transposes.
    x1_cn = x1.reshape(B, C, N)
    x2_cn = x2.reshape(B, C, N)

    # Fold the 1/sqrt(N) attention scale into the Q projection.
    scale = 1.0 / (float(N) ** 0.5)
    wq_p = jnp.zeros((Cp, C), jnp.float32).at[:C].set(wq * scale)
    bq_p = jnp.zeros((Cp, 1), jnp.float32).at[:C, 0].set(bq * scale)

    # Fused, sublane-aligned K/V projection:
    #   rows [0, C)        : Wk          rows [C, Cp)          : zero pad
    #   rows [Cp, Cp+C)    : Wv          row  Cp+C             : denom (w=0, b=1)
    #   rows [Cp+C+1, Cp+Cv): zero pad
    wkv = (jnp.zeros((Cp + Cv, C), jnp.float32)
           .at[:C].set(wk)
           .at[Cp:Cp + C].set(wv))
    bkv = (jnp.zeros((Cp + Cv, 1), jnp.float32)
           .at[:C, 0].set(bk)
           .at[Cp:Cp + C, 0].set(bv)
           .at[Cp + C, 0].set(1.0))

    grid = (B, N // tq, N // tk)

    ctx_cn = pl.pallas_call(
        _cross_attn_kernel,
        out_shape=jax.ShapeDtypeStruct((B, C, N), jnp.float32),
        grid_spec=pltpu.PrefetchScalarGridSpec(
            num_scalar_prefetch=0,
            grid=grid,
            in_specs=[
                pl.BlockSpec((1, C, tq), lambda b, qi, ki: (b, 0, qi)),   # x1
                pl.BlockSpec((1, C, tk), lambda b, qi, ki: (b, 0, ki)),   # x2
                pl.BlockSpec((Cp, C), lambda b, qi, ki: (0, 0)),          # wq
                pl.BlockSpec((Cp, 1), lambda b, qi, ki: (0, 0)),          # bq
                pl.BlockSpec((Cp + Cv, C), lambda b, qi, ki: (0, 0)),     # wkv
                pl.BlockSpec((Cp + Cv, 1), lambda b, qi, ki: (0, 0)),     # bkv
            ],
            out_specs=pl.BlockSpec((1, C, tq), lambda b, qi, ki: (b, 0, qi)),
            scratch_shapes=[
                pltpu.VMEM((Cp, tq), sm_dtype),     # Q tile (lives across kv)
                pltpu.VMEM((1, tq), jnp.float32),   # running max
                pltpu.VMEM((Cv, tq), jnp.float32),  # running [ctx ; denom]
            ],
        ),
        compiler_params=pltpu.CompilerParams(
            # batch & q-tile parallel (keeps both v7x TCs busy even at B==1),
            # kv axis is the online-softmax reduction.
            dimension_semantics=("parallel", "parallel", "arbitrary"),
            vmem_limit_bytes=vmem_limit,
        ),
    )(x1_cn, x2_cn, wq_p, bq_p, wkv, bkv)

    # PyTorch: context is the contiguous (B, N, C) bmm output, then a RAW
    # .view(B, C, H, W) (no permute).  The kernel stores (B, C, N) to keep the
    # output lane-dense; undo with ONE output-side transpose, then the raw
    # reshape and the residual add (these fuse into a single pass under jit).
    ctx_nc = jnp.transpose(ctx_cn, (0, 2, 1))            # (B, N, C)
    return ctx_nc.reshape(B, C, H, W) + x1
    # TODO(synk): for throughput at tiny N (e.g. 16x16), pack several batch
    # elements per grid step (batched einsum) to amortize the ~0.35 us/step
    # fixed overhead; omitted here for clarity.


def _reference(x1, x2, wq, bq, wk, bk, wv, bv):
    """Pure-JAX reference mirroring the PyTorch forward."""
    B, C, H, W = x1.shape
    N = H * W

    def conv1x1(x, w, b):
        return jnp.einsum('oc,bchw->bohw', w, x) + b[None, :, None, None]

    Q = conv1x1(x1, wq, bq).reshape(B, C, N)
    K = conv1x1(x2, wk, bk).reshape(B, C, N)
    V = conv1x1(x2, wv, bv).reshape(B, C, N)
    scores = jnp.einsum('bci,bcj->bij', Q, K) / jnp.sqrt(jnp.float32(N))
    attn = jax.nn.softmax(scores, axis=-1)
    ctx = jnp.einsum('bij,bcj->bic', attn, V)        # (B, N, C)
    ctx = ctx.reshape(B, C, H, W)                    # raw reshape, like .view()
    return ctx + x1


def _make_inputs(key, B, C, H, W):
    k1, k2, kwq, kbq, kwk, kbk, kwv, kbv = jax.random.split(key, 8)
    x1 = jax.random.normal(k1, (B, C, H, W), dtype=jnp.float32)
    x2 = jax.random.normal(k2, (B, C, H, W), dtype=jnp.float32)
    pscale = 1.0 / jnp.sqrt(jnp.float32(C))
    wq = jax.random.normal(kwq, (C, C), dtype=jnp.float32) * pscale
    bq = jax.random.normal(kbq, (C,), dtype=jnp.float32) * pscale
    wk = jax.random.normal(kwk, (C, C), dtype=jnp.float32) * pscale
    bk = jax.random.normal(kbk, (C,), dtype=jnp.float32) * pscale
    wv = jax.random.normal(kwv, (C, C), dtype=jnp.float32) * pscale
    bv = jax.random.normal(kbv, (C,), dtype=jnp.float32) * pscale
    return (x1, x2, wq, bq, wk, bk, wv, bv)


if __name__ == "__main__":
    key = jax.random.PRNGKey(0)
    k_a, k_b = jax.random.split(key)

    # Primary shape from the module spec (single kv tile).
    args = _make_inputs(k_a, 2, 4, 16, 16)
    out = jax.block_until_ready(cross_attention_block(*args))
    ref = _reference(*args)
    assert out.shape == (2, 4, 16, 16)
    # bf16 scores/exp (on v6e/v7x) + bf16 context matmul + approx reciprocal.
    assert jnp.allclose(out, ref, atol=3e-2, rtol=3e-2), "mismatch vs reference"

    # Larger spatial size to exercise the multi-step online-softmax (flash) path.
    args2 = _make_inputs(k_b, 1, 4, 32, 32)
    out2 = jax.block_until_ready(cross_attention_block(*args2))
    ref2 = _reference(*args2)
    assert out2.shape == (1, 4, 32, 32)
    assert jnp.allclose(out2, ref2, atol=3e-2, rtol=3e-2), "mismatch vs reference (flash path)"

    print("KERNEL_OK")
</pallas_src>

<mosaic_0001>
module attributes {stable_mosaic.version = 11 : i64} {
  func.func @_cross_attn_kernel(%arg0: i32, %arg1: i32, %arg2: i32, %arg3: memref<1x4x256xf32, #tpu.memory_space<vmem>>, %arg4: memref<1x4x256xf32, #tpu.memory_space<vmem>>, %arg5: memref<8x4xf32, #tpu.memory_space<vmem>>, %arg6: memref<8x1xf32, #tpu.memory_space<vmem>>, %arg7: memref<16x4xf32, #tpu.memory_space<vmem>>, %arg8: memref<16x1xf32, #tpu.memory_space<vmem>>, %arg9: memref<1x4x256xf32, #tpu.memory_space<vmem>>, %arg10: memref<8x256xf32, #tpu.memory_space<vmem>>, %arg11: memref<1x256xf32, #tpu.memory_space<vmem>>, %arg12: memref<8x256xf32, #tpu.memory_space<vmem>>) attributes {dimension_semantics = [#tpu.dimension_semantics<parallel>, #tpu.dimension_semantics<parallel>, #tpu.dimension_semantics<arbitrary>], iteration_bounds = array<i64: 2, 1, 1>, scalar_prefetch = 0 : i64, scratch_operands = 3 : i64, tpu.core_type = #tpu.core_type<tc>, window_params = [{transform_indices = @transform_0, window_bounds = array<i64: 1, 4, 256>}, {transform_indices = @transform_1, window_bounds = array<i64: 1, 4, 256>}, {pipeline_mode = #tpu.pipeline_mode<synchronous>, transform_indices = @transform_2, window_bounds = array<i64: 8, 4>}, {pipeline_mode = #tpu.pipeline_mode<synchronous>, transform_indices = @transform_3, window_bounds = array<i64: 8, 1>}, {pipeline_mode = #tpu.pipeline_mode<synchronous>, transform_indices = @transform_4, window_bounds = array<i64: 16, 4>}, {pipeline_mode = #tpu.pipeline_mode<synchronous>, transform_indices = @transform_5, window_bounds = array<i64: 16, 1>}, {transform_indices = @transform_6, window_bounds = array<i64: 1, 4, 256>}]} {
    %c0_i32 = arith.constant 0 : i32
    %0 = arith.cmpi eq, %arg2, %c0_i32 : i32
    %1 = arith.extui %0 : i1 to i32
    %c0_i32_0 = arith.constant 0 : i32
    %2 = arith.cmpi ne, %1, %c0_i32_0 : i32
    scf.if %2 {
      %cst_22 = arith.constant 0xFF800000 : f32
      %35 = vector.broadcast %cst_22 : f32 to vector<1x256xf32>
      %c0_23 = arith.constant 0 : index
      %c0_24 = arith.constant 0 : index
      %36 = vector.load %arg11[%c0_23, %c0_24] : memref<1x256xf32, #tpu.memory_space<vmem>>, vector<1x256xf32>
      tpu.vector_store %arg11[%c0_23, %c0_24], %35 {strides = array<i32>} : memref<1x256xf32, #tpu.memory_space<vmem>>, vector<1x256xf32>,
      %cst_25 = arith.constant 0.000000e+00 : f32
      %37 = vector.broadcast %cst_25 : f32 to vector<8x256xf32>
      %c0_26 = arith.constant 0 : index
      %c0_27 = arith.constant 0 : index
      %38 = vector.load %arg12[%c0_26, %c0_27] : memref<8x256xf32, #tpu.memory_space<vmem>>, vector<8x256xf32>
      tpu.vector_store %arg12[%c0_26, %c0_27], %37 {strides = array<i32>} : memref<8x256xf32, #tpu.memory_space<vmem>>, vector<8x256xf32>,
      %c0_28 = arith.constant 0 : index
      %c0_29 = arith.constant 0 : index
      %39 = vector.load %arg5[%c0_28, %c0_29] : memref<8x4xf32, #tpu.memory_space<vmem>>, vector<8x4xf32>
      %c0_30 = arith.constant 0 : index
      %c0_31 = arith.constant 0 : index
      %c0_32 = arith.constant 0 : index
      %40 = vector.load %arg3[%c0_30, %c0_31, %c0_32] : memref<1x4x256xf32, #tpu.memory_space<vmem>>, vector<1x4x256xf32>
      %41 = vector.shape_cast %40 : vector<1x4x256xf32> to vector<4x256xf32>
      %cst_33 = arith.constant dense<0.000000e+00> : vector<8x256xf32>
      %42 = tpu.matmul %39, %41, %cst_33 {dimension_numbers = #tpu.dot_dimension_numbers<[1], [0], [0], [1], [0, 0, 1, 1], [], []>} : vector<8x4xf32>, vector<4x256xf32>, vector<8x256xf32> -> vector<8x256xf32>
      %c0_34 = arith.constant 0 : index
      %c0_35 = arith.constant 0 : index
      %43 = vector.load %arg6[%c0_34, %c0_35] : memref<8x1xf32, #tpu.memory_space<vmem>>, vector<8x1xf32>
      %44 = vector.broadcast %43 : vector<8x1xf32> to vector<8x256xf32>
      %45 = arith.addf %42, %44 : vector<8x256xf32>
      %c0_36 = arith.constant 0 : index
      %c0_37 = arith.constant 0 : index
      %46 = vector.load %arg10[%c0_36, %c0_37] : memref<8x256xf32, #tpu.memory_space<vmem>>, vector<8x256xf32>
      tpu.vector_store %arg10[%c0_36, %c0_37], %45 {strides = array<i32>} : memref<8x256xf32, #tpu.memory_space<vmem>>, vector<8x256xf32>,
    } else {
    }
    %c0 = arith.constant 0 : index
    %c0_1 = arith.constant 0 : index
    %3 = vector.load %arg7[%c0, %c0_1] : memref<16x4xf32, #tpu.memory_space<vmem>>, vector<16x4xf32>
    %c0_2 = arith.constant 0 : index
    %c0_3 = arith.constant 0 : index
    %c0_4 = arith.constant 0 : index
    %4 = vector.load %arg4[%c0_2, %c0_3, %c0_4] : memref<1x4x256xf32, #tpu.memory_space<vmem>>, vector<1x4x256xf32>
    %5 = vector.shape_cast %4 : vector<1x4x256xf32> to vector<4x256xf32>
    %cst = arith.constant dense<0.000000e+00> : vector<16x256xf32>
    %6 = tpu.matmul %3, %5, %cst {dimension_numbers = #tpu.dot_dimension_numbers<[1], [0], [0], [1], [0, 0, 1, 1], [], []>} : vector<16x4xf32>, vector<4x256xf32>, vector<16x256xf32> -> vector<16x256xf32>
    %c0_5 = arith.constant 0 : index
    %c0_6 = arith.constant 0 : index
    %7 = vector.load %arg8[%c0_5, %c0_6] : memref<16x1xf32, #tpu.memory_space<vmem>>, vector<16x1xf32>
    %8 = vector.broadcast %7 : vector<16x1xf32> to vector<16x256xf32>
    %9 = arith.addf %6, %8 : vector<16x256xf32>
    %10 = vector.extract_strided_slice %9 {offsets = [0, 0], sizes = [8, 256], strides = [1, 1]} : vector<16x256xf32> to vector<8x256xf32>
    %11 = vector.extract_strided_slice %9 {offsets = [8, 0], sizes = [8, 256], strides = [1, 1]} : vector<16x256xf32> to vector<8x256xf32>
    %c0_7 = arith.constant 0 : index
    %c0_8 = arith.constant 0 : index
    %12 = vector.load %arg10[%c0_7, %c0_8] : memref<8x256xf32, #tpu.memory_space<vmem>>, vector<8x256xf32>
    %cst_9 = arith.constant dense<0.000000e+00> : vector<256x256xf32>
    %13 = tpu.matmul %10, %12, %cst_9 {dimension_numbers = #tpu.dot_dimension_numbers<[0], [0], [1], [1], [0, 1, 1, 1], [], []>} : vector<8x256xf32>, vector<8x256xf32>, vector<256x256xf32> -> vector<256x256xf32>
    %c0_10 = arith.constant 0 : index
    %c0_11 = arith.constant 0 : index
    %14 = vector.load %arg11[%c0_10, %c0_11] : memref<1x256xf32, #tpu.memory_space<vmem>>, vector<1x256xf32>
    %cst_12 = arith.constant dense<0xFF800000> : vector<256xf32>
    %15 = vector.multi_reduction <maximumf>, %13, %cst_12 [0] : vector<256x256xf32> to vector<256xf32>
    %16 = vector.shape_cast %15 : vector<256xf32> to vector<1x256xf32>
    %17 = arith.maximumf %14, %16 : vector<1x256xf32>
    %18 = arith.subf %14, %17 : vector<1x256xf32>
    %19 = math.exp %18 : vector<1x256xf32>
    %20 = vector.broadcast %17 : vector<1x256xf32> to vector<256x256xf32>
    %21 = arith.subf %13, %20 : vector<256x256xf32>
    %22 = math.exp %21 : vector<256x256xf32>
    %23 = arith.truncf %22 : vector<256x256xf32> to vector<256x256xbf16>
    %24 = arith.truncf %11 : vector<8x256xf32> to vector<8x256xbf16>
    %cst_13 = arith.constant dense<0.000000e+00> : vector<8x256xf32>
    %25 = tpu.matmul %24, %23, %cst_13 {dimension_numbers = #tpu.dot_dimension_numbers<[1], [0], [0], [1], [0, 0, 1, 1], [], []>} : vector<8x256xbf16>, vector<256x256xbf16>, vector<8x256xf32> -> vector<8x256xf32>
    %c0_14 = arith.constant 0 : index
    %c0_15 = arith.constant 0 : index
    %26 = vector.load %arg12[%c0_14, %c0_15] : memref<8x256xf32, #tpu.memory_space<vmem>>, vector<8x256xf32>
    %27 = vector.broadcast %19 : vector<1x256xf32> to vector<8x256xf32>
    %28 = arith.mulf %27, %26 : vector<8x256xf32>
    %29 = arith.addf %28, %25 : vector<8x256xf32>
    %c0_16 = arith.constant 0 : index
    %c0_17 = arith.constant 0 : index
    %30 = vector.load %arg12[%c0_16, %c0_17] : memref<8x256xf32, #tpu.memory_space<vmem>>, vector<8x256xf32>
    tpu.vector_store %arg12[%c0_16, %c0_17], %29 {strides = array<i32>} : memref<8x256xf32, #tpu.memory_space<vmem>>, vector<8x256xf32>,
    %c0_18 = arith.constant 0 : index
    %c0_19 = arith.constant 0 : index
    %31 = vector.load %arg11[%c0_18, %c0_19] : memref<1x256xf32, #tpu.memory_space<vmem>>, vector<1x256xf32>
    tpu.vector_store %arg11[%c0_18, %c0_19], %17 {strides = array<i32>} : memref<1x256xf32, #tpu.memory_space<vmem>>, vector<1x256xf32>,
    %c0_i32_20 = arith.constant 0 : i32
    %32 = arith.cmpi eq, %arg2, %c0_i32_20 : i32
    %33 = arith.extui %32 : i1 to i32
    %c0_i32_21 = arith.constant 0 : i32
    %34 = arith.cmpi ne, %33, %c0_i32_21 : i32
    scf.if %34 {
      %c0_22 = arith.constant 0 : index
      %c0_23 = arith.constant 0 : index
      %35 = vector.load %arg12[%c0_22, %c0_23] : memref<8x256xf32, #tpu.memory_space<vmem>>, vector<8x256xf32>
      %36 = vector.extract_strided_slice %35 {offsets = [4, 0], sizes = [1, 256], strides = [1, 1]} : vector<8x256xf32> to vector<1x256xf32>
      %37 = tpu.reciprocal %36 {approx = true} : vector<1x256xf32> -> vector<1x256xf32>
      %38 = vector.extract_strided_slice %35 {offsets = [0, 0], sizes = [4, 256], strides = [1, 1]} : vector<8x256xf32> to vector<4x256xf32>
      %39 = vector.broadcast %37 : vector<1x256xf32> to vector<4x256xf32>
      %40 = arith.mulf %38, %39 : vector<4x256xf32>
      %c0_24 = arith.constant 0 : index
      %c0_25 = arith.constant 0 : index
      %c0_26 = arith.constant 0 : index
      %41 = vector.load %arg9[%c0_24, %c0_25, %c0_26] : memref<1x4x256xf32, #tpu.memory_space<vmem>>, vector<1x4x256xf32>
      %42 = vector.shape_cast %41 : vector<1x4x256xf32> to vector<4x256xf32>
      %43 = vector.shape_cast %40 : vector<4x256xf32> to vector<1x4x256xf32>
      tpu.vector_store %arg9[%c0_24, %c0_25, %c0_26], %43 {strides = array<i32>} : memref<1x4x256xf32, #tpu.memory_space<vmem>>, vector<1x4x256xf32>,
    } else {
    }
    return
  }
  func.func @transform_0(%arg0: i32, %arg1: i32, %arg2: i32) -> (i32, i32, i32) {
    %c0_i32 = arith.constant 0 : i32
    %c0_i32_0 = arith.constant 0 : i32
    return %arg0, %c0_i32, %arg1 : i32, i32, i32
  }
  func.func @transform_1(%arg0: i32, %arg1: i32, %arg2: i32) -> (i32, i32, i32) {
    %c0_i32 = arith.constant 0 : i32
    %c0_i32_0 = arith.constant 0 : i32
    return %arg0, %c0_i32, %arg2 : i32, i32, i32
  }
  func.func @transform_2(%arg0: i32, %arg1: i32, %arg2: i32) -> (i32, i32) {
    %c0_i32 = arith.constant 0 : i32
    %c0_i32_0 = arith.constant 0 : i32
    %c0_i32_1 = arith.constant 0 : i32
    return %c0_i32, %c0_i32_0 : i32, i32
  }
  func.func @transform_3(%arg0: i32, %arg1: i32, %arg2: i32) -> (i32, i32) {
    %c0_i32 = arith.constant 0 : i32
    %c0_i32_0 = arith.constant 0 : i32
    %c0_i32_1 = arith.constant 0 : i32
    return %c0_i32, %c0_i32_0 : i32, i32
  }
  func.func @transform_4(%arg0: i32, %arg1: i32, %arg2: i32) -> (i32, i32) {
    %c0_i32 = arith.constant 0 : i32
    %c0_i32_0 = arith.constant 0 : i32
    %c0_i32_1 = arith.constant 0 : i32
    return %c0_i32, %c0_i32_0 : i32, i32
  }
  func.func @transform_5(%arg0: i32, %arg1: i32, %arg2: i32) -> (i32, i32) {
    %c0_i32 = arith.constant 0 : i32
    %c0_i32_0 = arith.constant 0 : i32
    %c0_i32_1 = arith.constant 0 : i32
    return %c0_i32, %c0_i32_0 : i32, i32
  }
  func.func @transform_6(%arg0: i32, %arg1: i32, %arg2: i32) -> (i32, i32, i32) {
    %c0_i32 = arith.constant 0 : i32
    %c0_i32_0 = arith.constant 0 : i32
    return %arg0, %c0_i32, %arg1 : i32, i32, i32
  }
}

</mosaic_0001>

<llo_original>
// kernel: cross_attention_block.1
$region0: #{cross_attention_block.1}
  #allocation0 [shape = 'u32[]', space=smem, size = 0x4, offset = 0x4, fixed_abs, tag = 'smem constant byte address 0x4 - core index']
  #allocation1 [shape = 'u32[144,128]{1,0:T(1,128)}', space=vmem, size = 0x12000, scoped, tag = 'internal scratch']
  #allocation2 [shape = 'f32[8,256]{1,0:T(8,128)}', space=vmem, size = 0x2000, scoped, tag = 'scratch operand']
  #allocation3 [shape = 'f32[1,256]{1,0:T(1,128)}', space=vmem, size = 0x400, scoped, tag = 'scratch operand']
  #allocation4 [shape = 'f32[8,256]{1,0:T(8,128)}', space=vmem, size = 0x2000, scoped, tag = 'scratch operand']
  %s0 = inlined_call_operand.hbm [shape: f32[2,4,256], index: 0, kind: input, shape index: {}]
  %s1 = inlined_call_operand.hbm [shape: f32[2,4,256], index: 1, kind: input, shape index: {}]
  %s2 = inlined_call_operand.hbm [shape: f32[8,4], index: 2, kind: input, shape index: {}]
  %s3 = inlined_call_operand.hbm [shape: f32[8,1], index: 3, kind: input, shape index: {}]
  %s4 = inlined_call_operand.hbm [shape: f32[16,4], index: 4, kind: input, shape index: {}]
  %s5 = inlined_call_operand.hbm [shape: f32[16,1], index: 5, kind: input, shape index: {}]
  %s6 = inlined_call_operand.hbm [shape: f32[2,4,256], index: 6, kind: output, shape index: {}]
  %s7 = sld [smem:[#allocation0]]
  $region89: #{cross_attention_block.1} parent=0
    _
  %s9 = ssub.s32 1, %s7
  %s10 = scalar_select 0, %s9, %s7
  $region1: #{cross_attention_block.1} parent=0
    #allocation5 [shape = 'u8[8192]{0}', space=vmem, size = 0x2000, scoped, tag = 'input window, operand 0']
    #allocation6 [shape = 's32[2]{0}', space=sflag, size = 0x8, scoped, tag = 'scoped memory for cross_attention_block.1']
    #allocation7 [shape = 's32[2]{0}', space=sflag, size = 0x8, scoped, tag = 'scoped memory for cross_attention_block.1']
    #allocation8 [shape = 'u8[8192]{0}', space=vmem, size = 0x2000, scoped, tag = 'input window, operand 1']
    #allocation9 [shape = 's32[2]{0}', space=sflag, size = 0x8, scoped, tag = 'scoped memory for cross_attention_block.1']
    #allocation10 [shape = 'u8[4096]{0}', space=vmem, size = 0x1000, scoped, tag = 'input window, operand 2, single buffered']
    #allocation11 [shape = 'u8[4096]{0}', space=vmem, size = 0x1000, scoped, tag = 'input window, operand 3, single buffered']
    #allocation12 [shape = 's32[1]{0}', space=sflag, size = 0x4, scoped, tag = 'scoped memory for cross_attention_block.1']
    #allocation13 [shape = 'u8[8192]{0}', space=vmem, size = 0x2000, scoped, tag = 'input window, operand 4, single buffered']
    #allocation14 [shape = 'u8[8192]{0}', space=vmem, size = 0x2000, scoped, tag = 'input window, operand 5, single buffered']
    #allocation15 [shape = 's32[1]{0}', space=sflag, size = 0x4, scoped, tag = 'scoped memory for cross_attention_block.1']
    #allocation16 [shape = 'u8[8192]{0}', space=vmem, size = 0x2000, scoped, tag = 'output window, operand 0']
    %11 = vsyncpa [#allocation6], 0
    %s12 = scalar_lea.sflag [#allocation6], 1
    %13 = vsyncpa %s12, 0
    %14 = vsyncpa [#allocation9], 0
    %s15 = scalar_lea.sflag [#allocation9], 1
    %16 = vsyncpa %s15, 0
    %17 = vsyncpa [#allocation12], 0
    %18 = vsyncpa [#allocation15], 0
    %19 = vsyncpa [#allocation7], 0
    %s20 = scalar_lea.sflag [#allocation7], 1
    %21 = vsyncpa %s20, 0
    loop: start=0, step=1, limit=4
    $region2: #{cross_attention_block.1} parent=1 // loop_pre_header
      _
    $region3: #{cross_attention_block.1} parent=1 // loop_header
      %s23 = sphi 0, %s27
      %p24 = scmp.ge.s32.totalorder %s23, 4
      %s30 = sphi 0, %s49
      %s31 = sphi 0, %s45
      %s32 = sphi 0, %s41
      %s33 = sphi 0, %s30
      %s34 = sphi 0, %s31
      %s35 = sphi 0, %s32
      %s36 = sphi 0, %s33
      %s37 = sphi 0, %s34
      %s38 = sphi 0, %s35
      %s54 = sphi 0, %s56
      %s57 = sphi 0, %s54
      %s58 = sphi 0, %s57
      %s74 = sphi 0, %s58
      %s82 = sphi 0, %s84
      %s85 = sphi 0, %s82
      %s86 = sphi 0, %s85
      %s102 = sphi 0, %s86
      %s106 = sphi 0, %s106
      %s108 = sphi 0, %s106
      %s109 = sphi 0, %s108
      %s123 = sphi 0, %s109
      %s127 = sphi 0, %s127
      %s129 = sphi 0, %s127
      %s130 = sphi 0, %s129
      %s144 = sphi 0, %s130
      %s148 = sphi 0, %s148
      %s150 = sphi 0, %s148
      %s151 = sphi 0, %s150
      %s165 = sphi 0, %s151
      %s169 = sphi 0, %s169
      %s171 = sphi 0, %s169
      %s172 = sphi 0, %s171
      %s186 = sphi 0, %s172
      %s194 = sphi 0, %s196
      %s197 = sphi 0, %s194
      %s198 = sphi 0, %s197
      %s214 = sphi 0, %s198
    $region4: #{cross_attention_block.1} parent=1 // loop_header_branch
      %26 = sbr.rel (%p24) target = $region8
    $region5: #{cross_attention_block.1} parent=1 // loop_body
      %s28 = ssub.s32 %s23, 1
      %s29 = ssub.s32 %s23, 2
      %s39 = sadd.s32 1, %s32
      %p40 = scmp.ge.s32.totalorder %s39, 1
      %s41 = scalar_select %p40, 0, %s39
      %s42 = sadd.s32 1, %s31
      %s43 = scalar_select %p40, %s42, %s31
      %p44 = scmp.ge.s32.totalorder %s43, 1
      %s45 = scalar_select %p44, 0, %s43
      %s46 = sadd.s32 1, %s30
      %s47 = scalar_select %p44, %s46, %s30
      %p48 = scmp.ge.s32.totalorder %s47, 2
      %s49 = scalar_select %p48, 0, %s47
      %s50 = ssub.s32 %s30, %s49
      %s51 = ssub.s32 %s31, %s45
      %s52 = sor.u32 %s50, %s51
      %p53 = scmp.eq.s32.totalorder %s52, 0
      %s55 = sadd.s32 %s54, 1
      %s56 = scalar_select %p53, %s54, %s55
      %p59 = pneg %p53
      %p60 = scmp.eq.s32.totalorder %s23, 1
      %p61 = por %p59, %p60
      %p62 = scmp.ne.s32.totalorder %s54, %s57
      %p63 = scmp.eq.s32.totalorder %s23, 0
      %p64 = por %p62, %p63
      %p65 = scmp.ne.s32.totalorder %s54, %s57
      %p66 = scmp.eq.s32.totalorder %s28, 1
      %p67 = por %p65, %p66
      %p68 = scmp.ne.s32.totalorder %s57, %s58
      %p69 = scmp.eq.s32.totalorder %s28, 0
      %p70 = por %p68, %p69
      %p71 = scmp.ne.s32.totalorder %s57, %s58
      %p72 = scmp.eq.s32.totalorder %s29, 1
      %p73 = por %p71, %p72
      %p75 = scmp.ne.s32.totalorder %s58, %s74
      %p76 = scmp.eq.s32.totalorder %s29, 0
      %p77 = por %p75, %p76
      %s78 = ssub.s32 %s30, %s49
      %s79 = ssub.s32 %s32, %s41
      %s80 = sor.u32 %s78, %s79
      %p81 = scmp.eq.s32.totalorder %s80, 0
      %s83 = sadd.s32 %s82, 1
      %s84 = scalar_select %p81, %s82, %s83
      %p87 = pneg %p81
      %p88 = scmp.eq.s32.totalorder %s23, 1
      %p89 = por %p87, %p88
      %p90 = scmp.ne.s32.totalorder %s82, %s85
      %p91 = scmp.eq.s32.totalorder %s23, 0
      %p92 = por %p90, %p91
      %p93 = scmp.ne.s32.totalorder %s82, %s85
      %p94 = scmp.eq.s32.totalorder %s28, 1
      %p95 = por %p93, %p94
      %p96 = scmp.ne.s32.totalorder %s85, %s86
      %p97 = scmp.eq.s32.totalorder %s28, 0
      %p98 = por %p96, %p97
      %p99 = scmp.ne.s32.totalorder %s85, %s86
      %p100 = scmp.eq.s32.totalorder %s29, 1
      %p101 = por %p99, %p100
      %p103 = scmp.ne.s32.totalorder %s86, %s102
      %p104 = scmp.eq.s32.totalorder %s29, 0
      %p105 = por %p103, %p104
      %s107 = sadd.s32 %s106, 1
      %p110 = scmp.eq.s32.totalorder %s23, 1
      %p111 = scmp.ne.s32.totalorder %s106, %s108
      %p112 = scmp.eq.s32.totalorder %s23, 0
      %p113 = por %p111, %p112
      %p114 = scmp.ne.s32.totalorder %s106, %s108
      %p115 = scmp.eq.s32.totalorder %s28, 1
      %p116 = por %p114, %p115
      %p117 = scmp.ne.s32.totalorder %s108, %s109
      %p118 = scmp.eq.s32.totalorder %s28, 0
      %p119 = por %p117, %p118
      %p120 = scmp.ne.s32.totalorder %s108, %s109
      %p121 = scmp.eq.s32.totalorder %s29, 1
      %p122 = por %p120, %p121
      %p124 = scmp.ne.s32.totalorder %s109, %s123
      %p125 = scmp.eq.s32.totalorder %s29, 0
      %p126 = por %p124, %p125
      %s128 = sadd.s32 %s127, 1
      %p131 = scmp.eq.s32.totalorder %s23, 1
      %p132 = scmp.ne.s32.totalorder %s127, %s129
      %p133 = scmp.eq.s32.totalorder %s23, 0
      %p134 = por %p132, %p133
      %p135 = scmp.ne.s32.totalorder %s127, %s129
      %p136 = scmp.eq.s32.totalorder %s28, 1
      %p137 = por %p135, %p136
      %p138 = scmp.ne.s32.totalorder %s129, %s130
      %p139 = scmp.eq.s32.totalorder %s28, 0
      %p140 = por %p138, %p139
      %p141 = scmp.ne.s32.totalorder %s129, %s130
      %p142 = scmp.eq.s32.totalorder %s29, 1
      %p143 = por %p141, %p142
      %p145 = scmp.ne.s32.totalorder %s130, %s144
      %p146 = scmp.eq.s32.totalorder %s29, 0
      %p147 = por %p145, %p146
      %s149 = sadd.s32 %s148, 1
      %p152 = scmp.eq.s32.totalorder %s23, 1
      %p153 = scmp.ne.s32.totalorder %s148, %s150
      %p154 = scmp.eq.s32.totalorder %s23, 0
      %p155 = por %p153, %p154
      %p156 = scmp.ne.s32.totalorder %s148, %s150
      %p157 = scmp.eq.s32.totalorder %s28, 1
      %p158 = por %p156, %p157
      %p159 = scmp.ne.s32.totalorder %s150, %s151
      %p160 = scmp.eq.s32.totalorder %s28, 0
      %p161 = por %p159, %p160
      %p162 = scmp.ne.s32.totalorder %s150, %s151
      %p163 = scmp.eq.s32.totalorder %s29, 1
      %p164 = por %p162, %p163
      %p166 = scmp.ne.s32.totalorder %s151, %s165
      %p167 = scmp.eq.s32.totalorder %s29, 0
      %p168 = por %p166, %p167
      %s170 = sadd.s32 %s169, 1
      %p173 = scmp.eq.s32.totalorder %s23, 1
      %p174 = scmp.ne.s32.totalorder %s169, %s171
      %p175 = scmp.eq.s32.totalorder %s23, 0
      %p176 = por %p174, %p175
      %p177 = scmp.ne.s32.totalorder %s169, %s171
      %p178 = scmp.eq.s32.totalorder %s28, 1
      %p179 = por %p177, %p178
      %p180 = scmp.ne.s32.totalorder %s171, %s172
      %p181 = scmp.eq.s32.totalorder %s28, 0
      %p182 = por %p180, %p181
      %p183 = scmp.ne.s32.totalorder %s171, %s172
      %p184 = scmp.eq.s32.totalorder %s29, 1
      %p185 = por %p183, %p184
      %p187 = scmp.ne.s32.totalorder %s172, %s186
      %p188 = scmp.eq.s32.totalorder %s29, 0
      %p189 = por %p187, %p188
      %s190 = ssub.s32 %s30, %s49
      %s191 = ssub.s32 %s31, %s45
      %s192 = sor.u32 %s190, %s191
      %p193 = scmp.eq.s32.totalorder %s192, 0
      %s195 = sadd.s32 %s194, 1
      %s196 = scalar_select %p193, %s194, %s195
      %p199 = pneg %p193
      %p200 = scmp.eq.s32.totalorder %s23, 1
      %p201 = por %p199, %p200
      %p202 = scmp.ne.s32.totalorder %s194, %s197
      %p203 = scmp.eq.s32.totalorder %s23, 0
      %p204 = por %p202, %p203
      %p205 = scmp.ne.s32.totalorder %s194, %s197
      %p206 = scmp.eq.s32.totalorder %s28, 1
      %p207 = por %p205, %p206
      %p208 = scmp.ne.s32.totalorder %s197, %s198
      %p209 = scmp.eq.s32.totalorder %s28, 0
      %p210 = por %p208, %p209
      %p211 = scmp.ne.s32.totalorder %s197, %s198
      %p212 = scmp.eq.s32.totalorder %s29, 1
      %p213 = por %p211, %p212
      %p215 = scmp.ne.s32.totalorder %s198, %s214
      %p216 = scmp.eq.s32.totalorder %s29, 0
      %p217 = por %p215, %p216
      %p218 = scmp.le.s32.totalorder 1, %s23
      %p219 = scmp.lt.s32.totalorder %s23, 3
      %p220 = pnand %p218, %p219
      %p221 = pneg %p220
      // Predicated region
      $region9: #{cross_attention_block.1} parent=5 // pred_check
        _
      $region10: #{cross_attention_block.1} parent=5 // pred_check_branch
        %223 = sbr.rel (%p220) target = $region12
      $region11: #{cross_attention_block.1} parent=5 // pred_region
        %s224 = ssub.s32 %s23, 1
        // Predicated region
        $region13: #{cross_attention_block.1} parent=11 // pred_check
          %p225 = pneg %p119
        $region14: #{cross_attention_block.1} parent=11 // pred_check_branch
          %227 = sbr.rel (%p225) target = $region16
        $region15: #{cross_attention_block.1} parent=11 // pred_region
          %s229 = ssub.s32 128, 128
          %230 = vsyncadd [#allocation9], %s229
          %s232 = sshll.u32 [#allocation10], 4
          %s233 = int_to_ptr.vmem [resolvable:$true] %s232
          %235 = dma.hbm_to_vmem [thread:$0]  %s2, 128, %s233, [#allocation9]
        $region16: #{cross_attention_block.1} parent=11 // pred_fallthru
          _
        // Predicated region
        $region17: #{cross_attention_block.1} parent=11 // pred_check
          %p236 = pneg %p140
        $region18: #{cross_attention_block.1} parent=11 // pred_check_branch
          %238 = sbr.rel (%p236) target = $region20
        $region19: #{cross_attention_block.1} parent=11 // pred_region
          %s240 = ssub.s32 128, 128
          %241 = vsyncadd [#allocation12], %s240
          %s243 = sshll.u32 [#allocation11], 4
          %s244 = int_to_ptr.vmem [resolvable:$true] %s243
          %246 = dma.hbm_to_vmem [thread:$0]  %s3, 128, %s244, [#allocation12]
        $region20: #{cross_attention_block.1} parent=11 // pred_fallthru
          _
        // Predicated region
        $region21: #{cross_attention_block.1} parent=11 // pred_check
          %p247 = pneg %p161
        $region22: #{cross_attention_block.1} parent=11 // pred_check_branch
          %249 = sbr.rel (%p247) target = $region24
        $region23: #{cross_attention_block.1} parent=11 // pred_region
          %s251 = ssub.s32 256, 256
          %252 = vsyncadd [#allocation12], %s251
          %s253 = sshll.u32 [#allocation13], 4
          %s254 = int_to_ptr.vmem [resolvable:$true] %s253
          %259 = dma.hbm_to_vmem [thread:$0]  %s4, 256, %s254, [#allocation12], 128, 128, 8
        $region24: #{cross_attention_block.1} parent=11 // pred_fallthru
          _
        // Predicated region
        $region25: #{cross_attention_block.1} parent=11 // pred_check
          %p260 = pneg %p182
        $region26: #{cross_attention_block.1} parent=11 // pred_check_branch
          %262 = sbr.rel (%p260) target = $region28
        $region27: #{cross_attention_block.1} parent=11 // pred_region
          %s264 = ssub.s32 256, 256
          %265 = vsyncadd [#allocation15], %s264
          %s266 = sshll.u32 [#allocation14], 4
          %s267 = int_to_ptr.vmem [resolvable:$true] %s266
          %272 = dma.hbm_to_vmem [thread:$0]  %s5, 256, %s267, [#allocation15], 128, 128, 8
        $region28: #{cross_attention_block.1} parent=11 // pred_fallthru
          _
      $region12: #{cross_attention_block.1} parent=5 // pred_fallthru
        _
      %p273 = scmp.lt.s32.totalorder %s23, 2
      // Predicated region
      $region29: #{cross_attention_block.1} parent=5 // pred_check
        %p274 = pneg %p273
      $region30: #{cross_attention_block.1} parent=5 // pred_check_branch
        %276 = sbr.rel (%p274) target = $region32
      $region31: #{cross_attention_block.1} parent=5 // pred_region
        // Predicated region
        $region33: #{cross_attention_block.1} parent=31 // pred_check
          %p277 = pneg %p64
        $region34: #{cross_attention_block.1} parent=31 // pred_check_branch
          %279 = sbr.rel (%p277) target = $region36
        $region35: #{cross_attention_block.1} parent=31 // pred_region
          %s280 = sand.u32 %s54, 1
          %s281 = scalar_lea.sflag [#allocation6], %s280
          %s282 = sand.u32 %s54, 1
          %s283 = smul.addr %s282, 8
          %s284 = scalar_lea.vmem [#allocation5], %s283
          %s285 = smul.u32 2, %s31
          %s287 = ssub.s32 128, 128
          %288 = vsyncadd %s281, %s287
          %s289 = smul.addr %s30, 2
          %s290 = sadd.s32 %s285, %s289
          %s291 = smul.addr %s290, 64
          %s292 = scalar_lea.hbm %s0, %s291
          %s294 = sshll.u32 %s284, 4
          %s295 = int_to_ptr.vmem [resolvable:$true] %s294
          %297 = dma.hbm_to_vmem [thread:$0]  %s292, 128, %s295, %s281
        $region36: #{cross_attention_block.1} parent=31 // pred_fallthru
          _
        // Predicated region
        $region37: #{cross_attention_block.1} parent=31 // pred_check
          %p298 = pneg %p92
        $region38: #{cross_attention_block.1} parent=31 // pred_check_branch
          %300 = sbr.rel (%p298) target = $region40
        $region39: #{cross_attention_block.1} parent=31 // pred_region
          %s301 = sand.u32 %s23, 1
          %s302 = scalar_lea.sflag [#allocation9], %s301
          %s303 = sand.u32 %s82, 1
          %s304 = smul.addr %s303, 8
          %s305 = scalar_lea.vmem [#allocation8], %s304
          %s306 = smul.u32 2, %s32
          %s308 = ssub.s32 128, 128
          %309 = vsyncadd %s302, %s308
          %s310 = smul.addr %s30, 2
          %s311 = sadd.s32 %s306, %s310
          %s312 = smul.addr %s311, 64
          %s313 = scalar_lea.hbm %s1, %s312
          %s315 = sshll.u32 %s305, 4
          %s316 = int_to_ptr.vmem [resolvable:$true] %s315
          %318 = dma.hbm_to_vmem [thread:$0]  %s313, 128, %s316, %s302
        $region40: #{cross_attention_block.1} parent=31 // pred_fallthru
          _
      $region32: #{cross_attention_block.1} parent=5 // pred_fallthru
        _
      %p319 = scmp.le.s32.totalorder 1, %s23
      %p320 = scmp.lt.s32.totalorder %s23, 3
      %p321 = pnand %p319, %p320
      %p322 = pneg %p321
      // Predicated region
      $region41: #{cross_attention_block.1} parent=5 // pred_check
        _
      $region42: #{cross_attention_block.1} parent=5 // pred_check_branch
        %324 = sbr.rel (%p321) target = $region44
      $region43: #{cross_attention_block.1} parent=5 // pred_region
        %s325 = ssub.s32 %s23, 1
        %s326 = sand.u32 %s57, 1
        %s327 = scalar_lea.sflag [#allocation6], %s326
        %s328 = sand.u32 %s57, 1
        %s329 = smul.addr %s328, 8
        %s330 = scalar_lea.vmem [#allocation5], %s329
        // Predicated region
        $region45: #{cross_attention_block.1} parent=43 // pred_check
          %p331 = pneg %p70
        $region46: #{cross_attention_block.1} parent=43 // pred_check_branch
          %333 = sbr.rel (%p331) target = $region48
        $region47: #{cross_attention_block.1} parent=43 // pred_region
          %334 = dma.done %s327, 128
        $region48: #{cross_attention_block.1} parent=43 // pred_fallthru
          _
        %s335 = sand.u32 %s28, 1
        %s336 = scalar_lea.sflag [#allocation9], %s335
        %s337 = sand.u32 %s85, 1
        %s338 = smul.addr %s337, 8
        %s339 = scalar_lea.vmem [#allocation8], %s338
        // Predicated region
        $region49: #{cross_attention_block.1} parent=43 // pred_check
          %p340 = pneg %p98
        $region50: #{cross_attention_block.1} parent=43 // pred_check_branch
          %342 = sbr.rel (%p340) target = $region52
        $region51: #{cross_attention_block.1} parent=43 // pred_region
          %343 = dma.done %s336, 128
        $region52: #{cross_attention_block.1} parent=43 // pred_fallthru
          _
        // Predicated region
        $region53: #{cross_attention_block.1} parent=43 // pred_check
          %p344 = pneg %p119
        $region54: #{cross_attention_block.1} parent=43 // pred_check_branch
          %346 = sbr.rel (%p344) target = $region56
        $region55: #{cross_attention_block.1} parent=43 // pred_region
          %347 = dma.done [#allocation9], 128
        $region56: #{cross_attention_block.1} parent=43 // pred_fallthru
          _
        // Predicated region
        $region57: #{cross_attention_block.1} parent=43 // pred_check
          %p348 = pneg %p140
        $region58: #{cross_attention_block.1} parent=43 // pred_check_branch
          %350 = sbr.rel (%p348) target = $region60
        $region59: #{cross_attention_block.1} parent=43 // pred_region
          %351 = dma.done [#allocation12], 128
        $region60: #{cross_attention_block.1} parent=43 // pred_fallthru
          _
        // Predicated region
        $region61: #{cross_attention_block.1} parent=43 // pred_check
          %p352 = pneg %p161
        $region62: #{cross_attention_block.1} parent=43 // pred_check_branch
          %354 = sbr.rel (%p352) target = $region64
        $region63: #{cross_attention_block.1} parent=43 // pred_region
          %355 = dma.done [#allocation12], 256
        $region64: #{cross_attention_block.1} parent=43 // pred_fallthru
          _
        // Predicated region
        $region65: #{cross_attention_block.1} parent=43 // pred_check
          %p356 = pneg %p182
        $region66: #{cross_attention_block.1} parent=43 // pred_check_branch
          %358 = sbr.rel (%p356) target = $region68
        $region67: #{cross_attention_block.1} parent=43 // pred_region
          %359 = dma.done [#allocation15], 256
        $region68: #{cross_attention_block.1} parent=43 // pred_fallthru
          _
        %s360 = sand.u32 %s57, 1
        %s361 = scalar_lea.sflag [#allocation6], %s360
        %s362 = sand.u32 %s57, 1
        %s363 = smul.addr %s362, 8
        %s364 = scalar_lea.vmem [#allocation5], %s363
        %p365 = pneg %p70
        %p366 = pneg %p67
        %s367 = sand.u32 %s28, 1
        %s368 = scalar_lea.sflag [#allocation9], %s367
        %s369 = sand.u32 %s85, 1
        %s370 = smul.addr %s369, 8
        %s371 = scalar_lea.vmem [#allocation8], %s370
        %p372 = pneg %p98
        %p373 = pneg %p95
        %p374 = pneg %p119
        %p375 = pneg %p116
        %p376 = pneg %p140
        %p377 = pneg %p137
        %p378 = pneg %p161
        %p379 = pneg %p158
        %p380 = pneg %p182
        %p381 = pneg %p179
        %p382 = pneg %p210
        %p383 = pneg %p207
        %s384 = sand.u32 %s197, 1
        %s385 = scalar_lea.sflag [#allocation7], %s384
        %s386 = sand.u32 %s197, 1
        %s387 = smul.addr %s386, 8
        %s388 = scalar_lea.vmem [#allocation16], %s387
        %s389 = smul.u32 2, %s34
        %s390 = smul.u32 2, %s35
        %s391 = smul.u32 2, %s34
        %p392 = scmp.eq.s32.totalorder %s35, 0
        // Predicated region
        $region69: #{cross_attention_block.1} parent=43 // pred_check
          %p393 = pneg %p392
        $region70: #{cross_attention_block.1} parent=43 // pred_check_branch
          %395 = sbr.rel (%p393) target = $region72
        $region71: #{cross_attention_block.1} parent=43 // pred_region
          %v396 = vlaneseq
          %vm397 = vcmp.ge.s32.totalorder %v396, 0
          %vm398 = vcmp.lt.s32.totalorder %v396, 256
          %vm399 = vmand %vm397, %vm398
          %400 = vst.msk [vmem:[#allocation3] sm:$0x3] %vm399, -inf
          %401 = vst [vmem:[#allocation4] sm:$0xff] 0.0
          %402 = vst [vmem:[#allocation4 + $0x8] sm:$0xff] 0.0
          %v403 = vld [vmem:[#allocation10] sm:$0xff]
          %v404 = vld [vmem:[%s330] sm:$0xff]
          %v405 = vld [vmem:[#allocation11] sm:$0xff]
          %407 = vset.pattern.permute.xlu0 0
          %408 = vperm.xlu0 %407, %v405
          %v409 = vpop.permute.xlu0 %408
          %v412 = vcombine.high %v404, %v404
          %vm413 = vcmask 31744
          %v415 = vsel %vm413, %v403, 0
          %vm417 = vcmask 1043456
          %v418 = vsel %vm417, %v404, 0
          %v420 = vsel %vm417, %v412, 0
          %422 = vmatprep.subr.mxu0 %v420
          %423 = vmatpush1.msra.mxu0 %v418
          %424 = vmatprep.subr.mxu0 0.0
          %425 = vmatpush1.msra.mxu0 0.0
          %426 = vmatprep.subr.mxu0 0.0
          %427 = vmatpush1.msra.mxu0 0.0
          %428 = vmatprep.subr.mxu0 0.0
          %429 = vmatpush1.msra.mxu0 0.0
          %430 = vmatprep.subr.mxu0 0.0
          %431 = vmatpush1.msra.mxu0 0.0
          %432 = vmatprep.subr.mxu0 0.0
          %433 = vmatpush1.msra.mxu0 0.0
          %434 = vmatprep.subr.mxu0 0.0
          %435 = vmatpush1.msra.mxu0 0.0
          %436 = vmatprep.subr.mxu0 0.0
          %437 = vmatpush1.msra.mxu0 0.0
          %438 = vmatprep.subr.mxu0 0.0
          %439 = vmatpush1.msra.mxu0 0.0
          %440 = vmatprep.subr.mxu0 0.0
          %441 = vmatpush1.msra.mxu0 0.0
          %442 = vmatprep.subr.mxu0 0.0
          %443 = vmatpush1.msra.mxu0 0.0
          %444 = vmatprep.subr.mxu0 0.0
          %445 = vmatpush1.msra.mxu0 0.0
          %446 = vmatprep.subr.mxu0 0.0
          %447 = vmatpush1.msra.mxu0 0.0
          %448 = vmatprep.subr.mxu0 0.0
          %449 = vmatpush1.msra.mxu0 0.0
          %450 = vmatprep.subr.mxu0 0.0
          %451 = vmatpush1.msra.mxu0 0.0
          %452 = vmatprep.subr.mxu0 0.0
          %453 = vmatpush1.msra.mxu0 0.0
          %454 = vmatprep.subr.mxu0 0.0
          %455 = vmatpush1.msra.mxu0 0.0
          %456 = vmatprep.subr.mxu0 0.0
          %457 = vmatpush1.msra.mxu0 0.0
          %458 = vmatprep.subr.mxu0 0.0
          %459 = vmatpush1.msra.mxu0 0.0
          %460 = vmatprep.subr.mxu0 0.0
          %461 = vmatpush1.msra.mxu0 0.0
          %462 = vmatprep.subr.mxu0 0.0
          %463 = vmatpush1.msra.mxu0 0.0
          %464 = vmatprep.subr.mxu0 0.0
          %465 = vmatpush1.msra.mxu0 0.0
          %466 = vmatprep.subr.mxu0 0.0
          %467 = vmatpush1.msra.mxu0 0.0
          %468 = vmatprep.subr.mxu0 0.0
          %469 = vmatpush1.msra.mxu0 0.0
          %470 = vmatprep.subr.mxu0 0.0
          %471 = vmatpush1.msra.mxu0 0.0
          %472 = vmatprep.subr.mxu0 0.0
          %473 = vmatpush1.msra.mxu0 0.0
          %474 = vmatprep.subr.mxu0 0.0
          %475 = vmatpush1.msra.mxu0 0.0
          %476 = vmatprep.subr.mxu0 0.0
          %477 = vmatpush1.msra.mxu0 0.0
          %478 = vmatprep.subr.mxu0 0.0
          %479 = vmatpush1.msra.mxu0 0.0
          %480 = vmatprep.subr.mxu0 0.0
          %481 = vmatpush1.msra.mxu0 0.0
          %482 = vmatprep.subr.mxu0 0.0
          %483 = vmatpush1.msra.mxu0 0.0
          %484 = vmatprep.subr.mxu0 0.0
          %485 = vmatpush1.msra.mxu0 0.0
          %486 = vmatprep.mubr.f32.mxu0 0.0
          %487 = vmatmul.mubr.f32.gmra.mrb[0].mxu0 %v415
          %v488 = vpop.f32.mrb[0].mxu0
          %v489 = vadd.f32 %v409, %v488
          %v490 = vpop.f32.mrb[0].mxu0
          %v491 = vadd.f32 %v409, %v490
          %492 = vdwg.mxu0
          %493 = vst [vmem:[#allocation2] sm:$0xff] %v489
          %494 = vst [vmem:[#allocation2 + $0x8] sm:$0xff] %v491
        $region72: #{cross_attention_block.1} parent=43 // pred_fallthru
          _
        %v495 = vld [vmem:[#allocation13] sm:$0xff]
        %v496 = vld [vmem:[#allocation13 + $0x8] sm:$0xff]
        %v497 = vld [vmem:[%s339] sm:$0xff]
        %v498 = vld [vmem:[#allocation14] sm:$0xff]
        %v499 = vld [vmem:[#allocation14 + $0x8] sm:$0xff]
        %501 = vset.pattern.permute.xlu0 0
        %502 = vperm.xlu0 %501, %v498
        %v503 = vpop.permute.xlu0 %502
        %506 = vset.pattern.permute.xlu0 0
        %507 = vperm.xlu0 %506, %v499
        %v508 = vpop.permute.xlu0 %507
        %v511 = vcombine.high %v497, %v497
        %vm512 = vcmask 31744
        %v514 = vsel %vm512, %v495, 0
        %v517 = vsel %vm512, %v496, 0
        %vm519 = vcmask 1043456
        %v520 = vsel %vm519, %v497, 0
        %v522 = vsel %vm519, %v511, 0
        %524 = vmatprep.subr.mxu0 %v522
        %525 = vmatpush1.msra.mxu0 %v520
        %526 = vmatprep.subr.mxu0 0.0
        %527 = vmatpush1.msra.mxu0 0.0
        %528 = vmatprep.subr.mxu0 0.0
        %529 = vmatpush1.msra.mxu0 0.0
        %530 = vmatprep.subr.mxu0 0.0
        %531 = vmatpush1.msra.mxu0 0.0
        %532 = vmatprep.subr.mxu0 0.0
        %533 = vmatpush1.msra.mxu0 0.0
        %534 = vmatprep.subr.mxu0 0.0
        %535 = vmatpush1.msra.mxu0 0.0
        %536 = vmatprep.subr.mxu0 0.0
        %537 = vmatpush1.msra.mxu0 0.0
        %538 = vmatprep.subr.mxu0 0.0
        %539 = vmatpush1.msra.mxu0 0.0
        %540 = vmatprep.subr.mxu0 0.0
        %541 = vmatpush1.msra.mxu0 0.0
        %542 = vmatprep.subr.mxu0 0.0
        %543 = vmatpush1.msra.mxu0 0.0
        %544 = vmatprep.subr.mxu0 0.0
        %545 = vmatpush1.msra.mxu0 0.0
        %546 = vmatprep.subr.mxu0 0.0
        %547 = vmatpush1.msra.mxu0 0.0
        %548 = vmatprep.subr.mxu0 0.0
        %549 = vmatpush1.msra.mxu0 0.0
        %550 = vmatprep.subr.mxu0 0.0
        %551 = vmatpush1.msra.mxu0 0.0
        %552 = vmatprep.subr.mxu0 0.0
        %553 = vmatpush1.msra.mxu0 0.0
        %554 = vmatprep.subr.mxu0 0.0
        %555 = vmatpush1.msra.mxu0 0.0
        %556 = vmatprep.subr.mxu0 0.0
        %557 = vmatpush1.msra.mxu0 0.0
        %558 = vmatprep.subr.mxu0 0.0
        %559 = vmatpush1.msra.mxu0 0.0
        %560 = vmatprep.subr.mxu0 0.0
        %561 = vmatpush1.msra.mxu0 0.0
        %562 = vmatprep.subr.mxu0 0.0
        %563 = vmatpush1.msra.mxu0 0.0
        %564 = vmatprep.subr.mxu0 0.0
        %565 = vmatpush1.msra.mxu0 0.0
        %566 = vmatprep.subr.mxu0 0.0
        %567 = vmatpush1.msra.mxu0 0.0
        %568 = vmatprep.subr.mxu0 0.0
        %569 = vmatpush1.msra.mxu0 0.0
        %570 = vmatprep.subr.mxu0 0.0
        %571 = vmatpush1.msra.mxu0 0.0
        %572 = vmatprep.subr.mxu0 0.0
        %573 = vmatpush1.msra.mxu0 0.0
        %574 = vmatprep.subr.mxu0 0.0
        %575 = vmatpush1.msra.mxu0 0.0
        %576 = vmatprep.subr.mxu0 0.0
        %577 = vmatpush1.msra.mxu0 0.0
        %578 = vmatprep.subr.mxu0 0.0
        %579 = vmatpush1.msra.mxu0 0.0
        %580 = vmatprep.subr.mxu0 0.0
        %581 = vmatpush1.msra.mxu0 0.0
        %582 = vmatprep.subr.mxu0 0.0
        %583 = vmatpush1.msra.mxu0 0.0
        %584 = vmatprep.subr.mxu0 0.0
        %585 = vmatpush1.msra.mxu0 0.0
        %586 = vmatprep.subr.mxu0 0.0
        %587 = vmatpush1.msra.mxu0 0.0
        %588 = vmatprep.mubr.f32.mxu0 0.0
        %589 = vmatmul.mubr.f32.gmra.mrb[0].mxu0 %v514
        %v590 = vpop.f32.mrb[0].mxu0
        %v591 = vadd.f32 %v503, %v590
        %v592 = vpop.f32.mrb[0].mxu0
        %v593 = vadd.f32 %v503, %v592
        %594 = vmatprep.mubr.f32.mxu0 0.0
        %595 = vmatmul.mubr.f32.gmra.mrb[0].mxu0 %v517
        %v596 = vpop.f32.mrb[0].mxu0
        %v597 = vadd.f32 %v508, %v596
        %v598 = vpop.f32.mrb[0].mxu0
        %v599 = vadd.f32 %v508, %v598
        %600 = vdwg.mxu0
        %v601 = vld [vmem:[#allocation2] sm:$0xff]
        %v602 = vld [vmem:[#allocation2 + $0x8] sm:$0xff]
        %603 = vxpose.xlu0.b32.start [1/16] %v591, 128
        %604 = vxpose.xlu0.b32.cont [2/16] 0.0, 128
        %605 = vxpose.xlu0.b32.cont [3/16] 0.0, 128
        %606 = vxpose.xlu0.b32.cont [4/16] 0.0, 128
        %607 = vxpose.xlu0.b32.cont [5/16] 0.0, 128
        %608 = vxpose.xlu0.b32.cont [6/16] 0.0, 128
        %609 = vxpose.xlu0.b32.cont [7/16] 0.0, 128
        %610 = vxpose.xlu0.b32.cont [8/16] 0.0, 128
        %611 = vxpose.xlu0.b32.cont [9/16] 0.0, 128
        %612 = vxpose.xlu0.b32.cont [10/16] 0.0, 128
        %613 = vxpose.xlu0.b32.cont [11/16] 0.0, 128
        %614 = vxpose.xlu0.b32.cont [12/16] 0.0, 128
        %615 = vxpose.xlu0.b32.cont [13/16] 0.0, 128
        %616 = vxpose.xlu0.b32.cont [14/16] 0.0, 128
        %617 = vxpose.xlu0.b32.cont [15/16] 0.0, 128
        %618 = vxpose.xlu0.b32.end [16/16] 0.0, 128
        %v619 = vpop.trf.xlu0
        %v620 = vpop.trf.xlu0
        %v621 = vpop.trf.xlu0
        %v622 = vpop.trf.xlu0
        %v623 = vpop.trf.xlu0
        %v624 = vpop.trf.xlu0
        %v625 = vpop.trf.xlu0
        %v626 = vpop.trf.xlu0
        %v627 = vpop.trf.xlu0
        %v628 = vpop.trf.xlu0
        %v629 = vpop.trf.xlu0
        %v630 = vpop.trf.xlu0
        %v631 = vpop.trf.xlu0
        %v632 = vpop.trf.xlu0
        %v633 = vpop.trf.xlu0
        %v634 = vpop.trf.xlu0
        %635 = vxpose.xlu0.b32.start [1/16] %v593, 128
        %636 = vxpose.xlu0.b32.cont [2/16] 0.0, 128
        %637 = vxpose.xlu0.b32.cont [3/16] 0.0, 128
        %638 = vxpose.xlu0.b32.cont [4/16] 0.0, 128
        %639 = vxpose.xlu0.b32.cont [5/16] 0.0, 128
        %640 = vxpose.xlu0.b32.cont [6/16] 0.0, 128
        %641 = vxpose.xlu0.b32.cont [7/16] 0.0, 128
        %642 = vxpose.xlu0.b32.cont [8/16] 0.0, 128
        %643 = vxpose.xlu0.b32.cont [9/16] 0.0, 128
        %644 = vxpose.xlu0.b32.cont [10/16] 0.0, 128
        %645 = vxpose.xlu0.b32.cont [11/16] 0.0, 128
        %646 = vxpose.xlu0.b32.cont [12/16] 0.0, 128
        %647 = vxpose.xlu0.b32.cont [13/16] 0.0, 128
        %648 = vxpose.xlu0.b32.cont [14/16] 0.0, 128
        %649 = vxpose.xlu0.b32.cont [15/16] 0.0, 128
        %650 = vxpose.xlu0.b32.end [16/16] 0.0, 128
        %v651 = vpop.trf.xlu0
        %v652 = vpop.trf.xlu0
        %v653 = vpop.trf.xlu0
        %v654 = vpop.trf.xlu0
        %v655 = vpop.trf.xlu0
        %v656 = vpop.trf.xlu0
        %v657 = vpop.trf.xlu0
        %v658 = vpop.trf.xlu0
        %v659 = vpop.trf.xlu0
        %v660 = vpop.trf.xlu0
        %v661 = vpop.trf.xlu0
        %v662 = vpop.trf.xlu0
        %v663 = vpop.trf.xlu0
        %v664 = vpop.trf.xlu0
        %v665 = vpop.trf.xlu0
        %v666 = vpop.trf.xlu0
        %vm667 = vcmask 64512
        %v669 = vsel %vm667, %v619, 0
        %v672 = vsel %vm667, %v620, 0
        %v675 = vsel %vm667, %v621, 0
        %v678 = vsel %vm667, %v622, 0
        %v681 = vsel %vm667, %v623, 0
        %v684 = vsel %vm667, %v624, 0
        %v687 = vsel %vm667, %v625, 0
        %v690 = vsel %vm667, %v626, 0
        %v693 = vsel %vm667, %v627, 0
        %v696 = vsel %vm667, %v628, 0
        %v699 = vsel %vm667, %v629, 0
        %v702 = vsel %vm667, %v630, 0
        %v705 = vsel %vm667, %v631, 0
        %v708 = vsel %vm667, %v632, 0
        %v711 = vsel %vm667, %v633, 0
        %v714 = vsel %vm667, %v634, 0
        %v717 = vsel %vm667, %v651, 0
        %v720 = vsel %vm667, %v652, 0
        %v723 = vsel %vm667, %v653, 0
        %v726 = vsel %vm667, %v654, 0
        %v729 = vsel %vm667, %v655, 0
        %v732 = vsel %vm667, %v656, 0
        %v735 = vsel %vm667, %v657, 0
        %v738 = vsel %vm667, %v658, 0
        %v741 = vsel %vm667, %v659, 0
        %v744 = vsel %vm667, %v660, 0
        %v747 = vsel %vm667, %v661, 0
        %v750 = vsel %vm667, %v662, 0
        %v753 = vsel %vm667, %v663, 0
        %v756 = vsel %vm667, %v664, 0
        %v759 = vsel %vm667, %v665, 0
        %v762 = vsel %vm667, %v666, 0
        %764 = vmatprep.subr.mxu0 %v602
        %765 = vmatpush1.msra.mxu0 %v601
        %766 = vmatprep.subr.mxu0 0.0
        %767 = vmatpush1.msra.mxu0 0.0
        %768 = vmatprep.subr.mxu0 0.0
        %769 = vmatpush1.msra.mxu0 0.0
        %770 = vmatprep.subr.mxu0 0.0
        %771 = vmatpush1.msra.mxu0 0.0
        %772 = vmatprep.subr.mxu0 0.0
        %773 = vmatpush1.msra.mxu0 0.0
        %774 = vmatprep.subr.mxu0 0.0
        %775 = vmatpush1.msra.mxu0 0.0
        %776 = vmatprep.subr.mxu0 0.0
        %777 = vmatpush1.msra.mxu0 0.0
        %778 = vmatprep.subr.mxu0 0.0
        %779 = vmatpush1.msra.mxu0 0.0
        %780 = vmatprep.subr.mxu0 0.0
        %781 = vmatpush1.msra.mxu0 0.0
        %782 = vmatprep.subr.mxu0 0.0
        %783 = vmatpush1.msra.mxu0 0.0
        %784 = vmatprep.subr.mxu0 0.0
        %785 = vmatpush1.msra.mxu0 0.0
        %786 = vmatprep.subr.mxu0 0.0
        %787 = vmatpush1.msra.mxu0 0.0
        %788 = vmatprep.subr.mxu0 0.0
        %789 = vmatpush1.msra.mxu0 0.0
        %790 = vmatprep.subr.mxu0 0.0
        %791 = vmatpush1.msra.mxu0 0.0
        %792 = vmatprep.subr.mxu0 0.0
        %793 = vmatpush1.msra.mxu0 0.0
        %794 = vmatprep.subr.mxu0 0.0
        %795 = vmatpush1.msra.mxu0 0.0
        %796 = vmatprep.subr.mxu0 0.0
        %797 = vmatpush1.msra.mxu0 0.0
        %798 = vmatprep.subr.mxu0 0.0
        %799 = vmatpush1.msra.mxu0 0.0
        %800 = vmatprep.subr.mxu0 0.0
        %801 = vmatpush1.msra.mxu0 0.0
        %802 = vmatprep.subr.mxu0 0.0
        %803 = vmatpush1.msra.mxu0 0.0
        %804 = vmatprep.subr.mxu0 0.0
        %805 = vmatpush1.msra.mxu0 0.0
        %806 = vmatprep.subr.mxu0 0.0
        %807 = vmatpush1.msra.mxu0 0.0
        %808 = vmatprep.subr.mxu0 0.0
        %809 = vmatpush1.msra.mxu0 0.0
        %810 = vmatprep.subr.mxu0 0.0
        %811 = vmatpush1.msra.mxu0 0.0
        %812 = vmatprep.subr.mxu0 0.0
        %813 = vmatpush1.msra.mxu0 0.0
        %814 = vmatprep.subr.mxu0 0.0
        %815 = vmatpush1.msra.mxu0 0.0
        %816 = vmatprep.subr.mxu0 0.0
        %817 = vmatpush1.msra.mxu0 0.0
        %818 = vmatprep.subr.mxu0 0.0
        %819 = vmatpush1.msra.mxu0 0.0
        %820 = vmatprep.subr.mxu0 0.0
        %821 = vmatpush1.msra.mxu0 0.0
        %822 = vmatprep.subr.mxu0 0.0
        %823 = vmatpush1.msra.mxu0 0.0
        %824 = vmatprep.subr.mxu0 0.0
        %825 = vmatpush1.msra.mxu0 0.0
        %826 = vmatprep.subr.mxu0 0.0
        %827 = vmatpush1.msra.mxu0 0.0
        %828 = vmatprep.mubr.f32.mxu0 0.0
        %829 = vmatmul.mubr.f32.gmra.mrb[0].mxu0 %v669
        %v830 = vpop.f32.mrb[0].mxu0
        %v831 = vadd.f32 0.0, %v830
        %v832 = vpop.f32.mrb[0].mxu0
        %v833 = vadd.f32 0.0, %v832
        %834 = vmatprep.mubr.f32.mxu0 0.0
        %835 = vmatmul.mubr.f32.gmra.mrb[0].mxu0 %v672
        %v836 = vpop.f32.mrb[0].mxu0
        %v837 = vadd.f32 0.0, %v836
        %v838 = vpop.f32.mrb[0].mxu0
        %v839 = vadd.f32 0.0, %v838
        %840 = vmatprep.mubr.f32.mxu0 0.0
        %841 = vmatmul.mubr.f32.gmra.mrb[0].mxu0 %v675
        %v842 = vpop.f32.mrb[0].mxu0
        %v843 = vadd.f32 0.0, %v842
        %v844 = vpop.f32.mrb[0].mxu0
        %v845 = vadd.f32 0.0, %v844
        %846 = vmatprep.mubr.f32.mxu0 0.0
        %847 = vmatmul.mubr.f32.gmra.mrb[0].mxu0 %v678
        %v848 = vpop.f32.mrb[0].mxu0
        %v849 = vadd.f32 0.0, %v848
        %v850 = vpop.f32.mrb[0].mxu0
        %v851 = vadd.f32 0.0, %v850
        %852 = vmatprep.mubr.f32.mxu0 0.0
        %853 = vmatmul.mubr.f32.gmra.mrb[0].mxu0 %v681
        %v854 = vpop.f32.mrb[0].mxu0
        %v855 = vadd.f32 0.0, %v854
        %v856 = vpop.f32.mrb[0].mxu0
        %v857 = vadd.f32 0.0, %v856
        %858 = vmatprep.mubr.f32.mxu0 0.0
        %859 = vmatmul.mubr.f32.gmra.mrb[0].mxu0 %v684
        %v860 = vpop.f32.mrb[0].mxu0
        %v861 = vadd.f32 0.0, %v860
        %v862 = vpop.f32.mrb[0].mxu0
        %v863 = vadd.f32 0.0, %v862
        %864 = vmatprep.mubr.f32.mxu0 0.0
        %865 = vmatmul.mubr.f32.gmra.mrb[0].mxu0 %v687
        %v866 = vpop.f32.mrb[0].mxu0
        %v867 = vadd.f32 0.0, %v866
        %v868 = vpop.f32.mrb[0].mxu0
        %v869 = vadd.f32 0.0, %v868
        %870 = vmatprep.mubr.f32.mxu0 0.0
        %871 = vmatmul.mubr.f32.gmra.mrb[0].mxu0 %v690
        %v872 = vpop.f32.mrb[0].mxu0
        %v873 = vadd.f32 0.0, %v872
        %v874 = vpop.f32.mrb[0].mxu0
        %v875 = vadd.f32 0.0, %v874
        %876 = vmatprep.mubr.f32.mxu0 0.0
        %877 = vmatmul.mubr.f32.gmra.mrb[0].mxu0 %v693
        %v878 = vpop.f32.mrb[0].mxu0
        %v879 = vadd.f32 0.0, %v878
        %v880 = vpop.f32.mrb[0].mxu0
        %v881 = vadd.f32 0.0, %v880
        %882 = vmatprep.mubr.f32.mxu0 0.0
        %883 = vmatmul.mubr.f32.gmra.mrb[0].mxu0 %v696
        %v884 = vpop.f32.mrb[0].mxu0
        %v885 = vadd.f32 0.0, %v884
        %v886 = vpop.f32.mrb[0].mxu0
        %v887 = vadd.f32 0.0, %v886
        %888 = vmatprep.mubr.f32.mxu0 0.0
        %889 = vmatmul.mubr.f32.gmra.mrb[0].mxu0 %v699
        %v890 = vpop.f32.mrb[0].mxu0
        %v891 = vadd.f32 0.0, %v890
        %v892 = vpop.f32.mrb[0].mxu0
        %v893 = vadd.f32 0.0, %v892
        %894 = vmatprep.mubr.f32.mxu0 0.0
        %895 = vmatmul.mubr.f32.gmra.mrb[0].mxu0 %v702
        %v896 = vpop.f32.mrb[0].mxu0
        %v897 = vadd.f32 0.0, %v896
        %v898 = vpop.f32.mrb[0].mxu0
        %v899 = vadd.f32 0.0, %v898
        %900 = vmatprep.mubr.f32.mxu0 0.0
        %901 = vmatmul.mubr.f32.gmra.mrb[0].mxu0 %v705
        %v902 = vpop.f32.mrb[0].mxu0
        %v903 = vadd.f32 0.0, %v902
        %v904 = vpop.f32.mrb[0].mxu0
        %v905 = vadd.f32 0.0, %v904
        %906 = vmatprep.mubr.f32.mxu0 0.0
        %907 = vmatmul.mubr.f32.gmra.mrb[0].mxu0 %v708
        %v908 = vpop.f32.mrb[0].mxu0
        %v909 = vadd.f32 0.0, %v908
        %v910 = vpop.f32.mrb[0].mxu0
        %v911 = vadd.f32 0.0, %v910
        %912 = vmatprep.mubr.f32.mxu0 0.0
        %913 = vmatmul.mubr.f32.gmra.mrb[0].mxu0 %v711
        %v914 = vpop.f32.mrb[0].mxu0
        %v915 = vadd.f32 0.0, %v914
        %v916 = vpop.f32.mrb[0].mxu0
        %v917 = vadd.f32 0.0, %v916
        %918 = vmatprep.mubr.f32.mxu0 0.0
        %919 = vmatmul.mubr.f32.gmra.mrb[0].mxu0 %v714
        %v920 = vpop.f32.mrb[0].mxu0
        %v921 = vadd.f32 0.0, %v920
        %v922 = vpop.f32.mrb[0].mxu0
        %v923 = vadd.f32 0.0, %v922
        %924 = vmatprep.mubr.f32.mxu0 0.0
        %925 = vmatmul.mubr.f32.gmra.mrb[0].mxu0 %v717
        %v926 = vpop.f32.mrb[0].mxu0
        %v927 = vadd.f32 0.0, %v926
        %v928 = vpop.f32.mrb[0].mxu0
        %v929 = vadd.f32 0.0, %v928
        %930 = vmatprep.mubr.f32.mxu0 0.0
        %931 = vmatmul.mubr.f32.gmra.mrb[0].mxu0 %v720
        %v932 = vpop.f32.mrb[0].mxu0
        %v933 = vadd.f32 0.0, %v932
        %v934 = vpop.f32.mrb[0].mxu0
        %v935 = vadd.f32 0.0, %v934
        %936 = vmatprep.mubr.f32.mxu0 0.0
        %937 = vmatmul.mubr.f32.gmra.mrb[0].mxu0 %v723
        %v938 = vpop.f32.mrb[0].mxu0
        %v939 = vadd.f32 0.0, %v938
        %v940 = vpop.f32.mrb[0].mxu0
        %v941 = vadd.f32 0.0, %v940
        %942 = vmatprep.mubr.f32.mxu0 0.0
        %943 = vmatmul.mubr.f32.gmra.mrb[0].mxu0 %v726
        %v944 = vpop.f32.mrb[0].mxu0
        %v945 = vadd.f32 0.0, %v944
        %v946 = vpop.f32.mrb[0].mxu0
        %v947 = vadd.f32 0.0, %v946
        %948 = vmatprep.mubr.f32.mxu0 0.0
        %949 = vmatmul.mubr.f32.gmra.mrb[0].mxu0 %v729
        %v950 = vpop.f32.mrb[0].mxu0
        %v951 = vadd.f32 0.0, %v950
        %v952 = vpop.f32.mrb[0].mxu0
        %v953 = vadd.f32 0.0, %v952
        %954 = vmatprep.mubr.f32.mxu0 0.0
        %955 = vmatmul.mubr.f32.gmra.mrb[0].mxu0 %v732
        %v956 = vpop.f32.mrb[0].mxu0
        %v957 = vadd.f32 0.0, %v956
        %v958 = vpop.f32.mrb[0].mxu0
        %v959 = vadd.f32 0.0, %v958
        %960 = vmatprep.mubr.f32.mxu0 0.0
        %961 = vmatmul.mubr.f32.gmra.mrb[0].mxu0 %v735
        %v962 = vpop.f32.mrb[0].mxu0
        %v963 = vadd.f32 0.0, %v962
        %v964 = vpop.f32.mrb[0].mxu0
        %v965 = vadd.f32 0.0, %v964
        %966 = vmatprep.mubr.f32.mxu0 0.0
        %967 = vmatmul.mubr.f32.gmra.mrb[0].mxu0 %v738
        %v968 = vpop.f32.mrb[0].mxu0
        %v969 = vadd.f32 0.0, %v968
        %v970 = vpop.f32.mrb[0].mxu0
        %v971 = vadd.f32 0.0, %v970
        %972 = vmatprep.mubr.f32.mxu0 0.0
        %973 = vmatmul.mubr.f32.gmra.mrb[0].mxu0 %v741
        %v974 = vpop.f32.mrb[0].mxu0
        %v975 = vadd.f32 0.0, %v974
        %v976 = vpop.f32.mrb[0].mxu0
        %v977 = vadd.f32 0.0, %v976
        %978 = vmatprep.mubr.f32.mxu0 0.0
        %979 = vmatmul.mubr.f32.gmra.mrb[0].mxu0 %v744
        %v980 = vpop.f32.mrb[0].mxu0
        %v981 = vadd.f32 0.0, %v980
        %v982 = vpop.f32.mrb[0].mxu0
        %v983 = vadd.f32 0.0, %v982
        %984 = vmatprep.mubr.f32.mxu0 0.0
        %985 = vmatmul.mubr.f32.gmra.mrb[0].mxu0 %v747
        %v986 = vpop.f32.mrb[0].mxu0
        %v987 = vadd.f32 0.0, %v986
        %v988 = vpop.f32.mrb[0].mxu0
        %v989 = vadd.f32 0.0, %v988
        %990 = vmatprep.mubr.f32.mxu0 0.0
        %991 = vmatmul.mubr.f32.gmra.mrb[0].mxu0 %v750
        %v992 = vpop.f32.mrb[0].mxu0
        %v993 = vadd.f32 0.0, %v992
        %v994 = vpop.f32.mrb[0].mxu0
        %v995 = vadd.f32 0.0, %v994
        %996 = vmatprep.mubr.f32.mxu0 0.0
        %997 = vmatmul.mubr.f32.gmra.mrb[0].mxu0 %v753
        %v998 = vpop.f32.mrb[0].mxu0
        %v999 = vadd.f32 0.0, %v998
        %v1000 = vpop.f32.mrb[0].mxu0
        %v1001 = vadd.f32 0.0, %v1000
        %1002 = vmatprep.mubr.f32.mxu0 0.0
        %1003 = vmatmul.mubr.f32.gmra.mrb[0].mxu0 %v756
        %v1004 = vpop.f32.mrb[0].mxu0
        %v1005 = vadd.f32 0.0, %v1004
        %v1006 = vpop.f32.mrb[0].mxu0
        %v1007 = vadd.f32 0.0, %v1006
        %1008 = vmatprep.mubr.f32.mxu0 0.0
        %1009 = vmatmul.mubr.f32.gmra.mrb[0].mxu0 %v759
        %v1010 = vpop.f32.mrb[0].mxu0
        %v1011 = vadd.f32 0.0, %v1010
        %v1012 = vpop.f32.mrb[0].mxu0
        %v1013 = vadd.f32 0.0, %v1012
        %1014 = vmatprep.mubr.f32.mxu0 0.0
        %1015 = vmatmul.mubr.f32.gmra.mrb[0].mxu0 %v762
        %v1016 = vpop.f32.mrb[0].mxu0
        %v1017 = vadd.f32 0.0, %v1016
        %v1018 = vpop.f32.mrb[0].mxu0
        %v1019 = vadd.f32 0.0, %v1018
        %1020 = vdwg.mxu0
        %v1021 = vld [vmem:[#allocation3] sm:$0x3]
        %v1022 = vmax.f32 %v831, %v843
        %v1023 = vmax.f32 %v837, %v849
        %v1024 = vmax.f32 %v1022, %v855
        %v1025 = vmax.f32 %v1023, %v861
        %v1026 = vmax.f32 %v1024, %v867
        %v1027 = vmax.f32 %v1025, %v873
        %v1028 = vmax.f32 %v1026, %v879
        %v1029 = vmax.f32 %v1027, %v885
        %v1030 = vmax.f32 %v1028, %v891
        %v1031 = vmax.f32 %v1029, %v897
        %v1032 = vmax.f32 %v1030, %v903
        %v1033 = vmax.f32 %v1031, %v909
        %v1034 = vmax.f32 %v1032, %v915
        %v1035 = vmax.f32 %v1033, %v921
        %v1036 = vmax.f32 %v1034, %v927
        %v1037 = vmax.f32 %v1035, %v933
        %v1038 = vmax.f32 %v1036, %v939
        %v1039 = vmax.f32 %v1037, %v945
        %v1040 = vmax.f32 %v1038, %v951
        %v1041 = vmax.f32 %v1039, %v957
        %v1042 = vmax.f32 %v1040, %v963
        %v1043 = vmax.f32 %v1041, %v969
        %v1044 = vmax.f32 %v1042, %v975
        %v1045 = vmax.f32 %v1043, %v981
        %v1046 = vmax.f32 %v1044, %v987
        %v1047 = vmax.f32 %v1045, %v993
        %v1048 = vmax.f32 %v1046, %v999
        %v1049 = vmax.f32 %v1047, %v1005
        %v1050 = vmax.f32 %v1048, %v1011
        %v1051 = vmax.f32 %v1049, %v1017
        %v1052 = vmax.f32 %v1050, %v1051
        %v1053 = vrot.slane %v1052, 4
        %v1054 = vmax.f32 %v1052, %v1053
        %v1055 = vrot.slane %v1054, 2
        %v1056 = vmax.f32 %v1054, %v1055
        %v1057 = vrot.slane %v1056, 1
        %v1058 = vmax.f32 %v1056, %v1057
        %v1059 = vmax.f32 %v833, %v845
        %v1060 = vmax.f32 %v839, %v851
        %v1061 = vmax.f32 %v1059, %v857
        %v1062 = vmax.f32 %v1060, %v863
        %v1063 = vmax.f32 %v1061, %v869
        %v1064 = vmax.f32 %v1062, %v875
        %v1065 = vmax.f32 %v1063, %v881
        %v1066 = vmax.f32 %v1064, %v887
        %v1067 = vmax.f32 %v1065, %v893
        %v1068 = vmax.f32 %v1066, %v899
        %v1069 = vmax.f32 %v1067, %v905
        %v1070 = vmax.f32 %v1068, %v911
        %v1071 = vmax.f32 %v1069, %v917
        %v1072 = vmax.f32 %v1070, %v923
        %v1073 = vmax.f32 %v1071, %v929
        %v1074 = vmax.f32 %v1072, %v935
        %v1075 = vmax.f32 %v1073, %v941
        %v1076 = vmax.f32 %v1074, %v947
        %v1077 = vmax.f32 %v1075, %v953
        %v1078 = vmax.f32 %v1076, %v959
        %v1079 = vmax.f32 %v1077, %v965
        %v1080 = vmax.f32 %v1078, %v971
        %v1081 = vmax.f32 %v1079, %v977
        %v1082 = vmax.f32 %v1080, %v983
        %v1083 = vmax.f32 %v1081, %v989
        %v1084 = vmax.f32 %v1082, %v995
        %v1085 = vmax.f32 %v1083, %v1001
        %v1086 = vmax.f32 %v1084, %v1007
        %v1087 = vmax.f32 %v1085, %v1013
        %v1088 = vmax.f32 %v1086, %v1019
        %v1089 = vmax.f32 %v1087, %v1088
        %v1090 = vrot.slane %v1089, 4
        %v1091 = vmax.f32 %v1089, %v1090
        %v1092 = vrot.slane %v1091, 2
        %v1093 = vmax.f32 %v1091, %v1092
        %v1094 = vrot.slane %v1093, 1
        %v1095 = vmax.f32 %v1093, %v1094
        %v1098 = vcombine.low %v1058, %v1095
        %v1100 = vunpack.c.l.s4 1966171168
        %v1101 = vunpack.c.0.s8 %v1100
        %v1102 = vlaneseq
        %v1103 = vshrl.u32 %v1102, 7
        %v1104 = vsub.s32 %v1101, %v1103
        %v1105 = vrot.slane %v1098, %v1104
        %v1107 = vunpack.c.l.s4 1966171168
        %v1108 = vunpack.c.0.s8 %v1107
        %v1109 = vlaneseq
        %v1110 = vshrl.u32 %v1109, 7
        %v1111 = vsub.s32 %v1108, %v1110
        %v1112 = vrot.slane %v1105, %v1111
        %v1114 = vmax.f32 %v1021, %v1112
        %v1115 = vsub.f32 %v1021, %v1114
        %v1116 = vmul.f32 %v1115, 1.442695
        %v1117 = vpow.pop %v1116
        %v1119 = vlaneseq
        %v1120 = vshrl.u32 %v1119, 7
        %v1121 = vsub.s32 0, %v1120
        %v1122 = vrot.slane %v1114, %v1121
        %v1123 = vlaneseq
        %v1124 = vshrl.u32 %v1123, 7
        %v1125 = vsub.s32 1, %v1124
        %v1126 = vrot.slane %v1114, %v1125
        %v1129 = vsub.f32 %v831, %v1122
        %v1130 = vsub.f32 %v833, %v1126
        %v1131 = vsub.f32 %v837, %v1122
        %v1132 = vsub.f32 %v839, %v1126
        %v1133 = vsub.f32 %v843, %v1122
        %v1134 = vsub.f32 %v845, %v1126
        %v1135 = vsub.f32 %v849, %v1122
        %v1136 = vsub.f32 %v851, %v1126
        %v1137 = vsub.f32 %v855, %v1122
        %v1138 = vsub.f32 %v857, %v1126
        %v1139 = vsub.f32 %v861, %v1122
        %v1140 = vsub.f32 %v863, %v1126
        %v1141 = vsub.f32 %v867, %v1122
        %v1142 = vsub.f32 %v869, %v1126
        %v1143 = vsub.f32 %v873, %v1122
        %v1144 = vsub.f32 %v875, %v1126
        %v1145 = vsub.f32 %v879, %v1122
        %v1146 = vsub.f32 %v881, %v1126
        %v1147 = vsub.f32 %v885, %v1122
        %v1148 = vsub.f32 %v887, %v1126
        %v1149 = vsub.f32 %v891, %v1122
        %v1150 = vsub.f32 %v893, %v1126
        %v1151 = vsub.f32 %v897, %v1122
        %v1152 = vsub.f32 %v899, %v1126
        %v1153 = vsub.f32 %v903, %v1122
        %v1154 = vsub.f32 %v905, %v1126
        %v1155 = vsub.f32 %v909, %v1122
        %v1156 = vsub.f32 %v911, %v1126
        %v1157 = vsub.f32 %v915, %v1122
        %v1158 = vsub.f32 %v917, %v1126
        %v1159 = vsub.f32 %v921, %v1122
        %v1160 = vsub.f32 %v923, %v1126
        %v1161 = vsub.f32 %v927, %v1122
        %v1162 = vsub.f32 %v929, %v1126
        %v1163 = vsub.f32 %v933, %v1122
        %v1164 = vsub.f32 %v935, %v1126
        %v1165 = vsub.f32 %v939, %v1122
        %v1166 = vsub.f32 %v941, %v1126
        %v1167 = vsub.f32 %v945, %v1122
        %v1168 = vsub.f32 %v947, %v1126
        %v1169 = vsub.f32 %v951, %v1122
        %v1170 = vsub.f32 %v953, %v1126
        %v1171 = vsub.f32 %v957, %v1122
        %v1172 = vsub.f32 %v959, %v1126
        %v1173 = vsub.f32 %v963, %v1122
        %v1174 = vsub.f32 %v965, %v1126
        %v1175 = vsub.f32 %v969, %v1122
        %v1176 = vsub.f32 %v971, %v1126
        %v1177 = vsub.f32 %v975, %v1122
        %v1178 = vsub.f32 %v977, %v1126
        %v1179 = vsub.f32 %v981, %v1122
        %v1180 = vsub.f32 %v983, %v1126
        %v1181 = vsub.f32 %v987, %v1122
        %v1182 = vsub.f32 %v989, %v1126
        %v1183 = vsub.f32 %v993, %v1122
        %v1184 = vsub.f32 %v995, %v1126
        %v1185 = vsub.f32 %v999, %v1122
        %v1186 = vsub.f32 %v1001, %v1126
        %v1187 = vsub.f32 %v1005, %v1122
        %v1188 = vsub.f32 %v1007, %v1126
        %v1189 = vsub.f32 %v1011, %v1122
        %v1190 = vsub.f32 %v1013, %v1126
        %v1191 = vsub.f32 %v1017, %v1122
        %v1192 = vsub.f32 %v1019, %v1126
        %v1193 = vmul.f32 %v1129, 1.442695
        %v1194 = vpow.pop %v1193
        %v1195 = vmul.f32 %v1130, 1.442695
        %v1196 = vpow.pop %v1195
        %v1197 = vmul.f32 %v1131, 1.442695
        %v1198 = vpow.pop %v1197
        %v1199 = vmul.f32 %v1132, 1.442695
        %v1200 = vpow.pop %v1199
        %v1201 = vmul.f32 %v1133, 1.442695
        %v1202 = vpow.pop %v1201
        %v1203 = vmul.f32 %v1134, 1.442695
        %v1204 = vpow.pop %v1203
        %v1205 = vmul.f32 %v1135, 1.442695
        %v1206 = vpow.pop %v1205
        %v1207 = vmul.f32 %v1136, 1.442695
        %v1208 = vpow.pop %v1207
        %v1209 = vmul.f32 %v1137, 1.442695
        %v1210 = vpow.pop %v1209
        %v1211 = vmul.f32 %v1138, 1.442695
        %v1212 = vpow.pop %v1211
        %v1213 = vmul.f32 %v1139, 1.442695
        %v1214 = vpow.pop %v1213
        %v1215 = vmul.f32 %v1140, 1.442695
        %v1216 = vpow.pop %v1215
        %v1217 = vmul.f32 %v1141, 1.442695
        %v1218 = vpow.pop %v1217
        %v1219 = vmul.f32 %v1142, 1.442695
        %v1220 = vpow.pop %v1219
        %v1221 = vmul.f32 %v1143, 1.442695
        %v1222 = vpow.pop %v1221
        %v1223 = vmul.f32 %v1144, 1.442695
        %v1224 = vpow.pop %v1223
        %v1225 = vmul.f32 %v1145, 1.442695
        %v1226 = vpow.pop %v1225
        %v1227 = vmul.f32 %v1146, 1.442695
        %v1228 = vpow.pop %v1227
        %v1229 = vmul.f32 %v1147, 1.442695
        %v1230 = vpow.pop %v1229
        %v1231 = vmul.f32 %v1148, 1.442695
        %v1232 = vpow.pop %v1231
        %v1233 = vmul.f32 %v1149, 1.442695
        %v1234 = vpow.pop %v1233
        %v1235 = vmul.f32 %v1150, 1.442695
        %v1236 = vpow.pop %v1235
        %v1237 = vmul.f32 %v1151, 1.442695
        %v1238 = vpow.pop %v1237
        %v1239 = vmul.f32 %v1152, 1.442695
        %v1240 = vpow.pop %v1239
        %v1241 = vmul.f32 %v1153, 1.442695
        %v1242 = vpow.pop %v1241
        %v1243 = vmul.f32 %v1154, 1.442695
        %v1244 = vpow.pop %v1243
        %v1245 = vmul.f32 %v1155, 1.442695
        %v1246 = vpow.pop %v1245
        %v1247 = vmul.f32 %v1156, 1.442695
        %v1248 = vpow.pop %v1247
        %v1249 = vmul.f32 %v1157, 1.442695
        %v1250 = vpow.pop %v1249
        %v1251 = vmul.f32 %v1158, 1.442695
        %v1252 = vpow.pop %v1251
        %v1253 = vmul.f32 %v1159, 1.442695
        %v1254 = vpow.pop %v1253
        %v1255 = vmul.f32 %v1160, 1.442695
        %v1256 = vpow.pop %v1255
        %v1257 = vmul.f32 %v1161, 1.442695
        %v1258 = vpow.pop %v1257
        %v1259 = vmul.f32 %v1162, 1.442695
        %v1260 = vpow.pop %v1259
        %v1261 = vmul.f32 %v1163, 1.442695
        %v1262 = vpow.pop %v1261
        %v1263 = vmul.f32 %v1164, 1.442695
        %v1264 = vpow.pop %v1263
        %v1265 = vmul.f32 %v1165, 1.442695
        %v1266 = vpow.pop %v1265
        %v1267 = vmul.f32 %v1166, 1.442695
        %v1268 = vpow.pop %v1267
        %v1269 = vmul.f32 %v1167, 1.442695
        %v1270 = vpow.pop %v1269
        %v1271 = vmul.f32 %v1168, 1.442695
        %v1272 = vpow.pop %v1271
        %v1273 = vmul.f32 %v1169, 1.442695
        %v1274 = vpow.pop %v1273
        %v1275 = vmul.f32 %v1170, 1.442695
        %v1276 = vpow.pop %v1275
        %v1277 = vmul.f32 %v1171, 1.442695
        %v1278 = vpow.pop %v1277
        %v1279 = vmul.f32 %v1172, 1.442695
        %v1280 = vpow.pop %v1279
        %v1281 = vmul.f32 %v1173, 1.442695
        %v1282 = vpow.pop %v1281
        %v1283 = vmul.f32 %v1174, 1.442695
        %v1284 = vpow.pop %v1283
        %v1285 = vmul.f32 %v1175, 1.442695
        %v1286 = vpow.pop %v1285
        %v1287 = vmul.f32 %v1176, 1.442695
        %v1288 = vpow.pop %v1287
        %v1289 = vmul.f32 %v1177, 1.442695
        %v1290 = vpow.pop %v1289
        %v1291 = vmul.f32 %v1178, 1.442695
        %v1292 = vpow.pop %v1291
        %v1293 = vmul.f32 %v1179, 1.442695
        %v1294 = vpow.pop %v1293
        %v1295 = vmul.f32 %v1180, 1.442695
        %v1296 = vpow.pop %v1295
        %v1297 = vmul.f32 %v1181, 1.442695
        %v1298 = vpow.pop %v1297
        %v1299 = vmul.f32 %v1182, 1.442695
        %v1300 = vpow.pop %v1299
        %v1301 = vmul.f32 %v1183, 1.442695
        %v1302 = vpow.pop %v1301
        %v1303 = vmul.f32 %v1184, 1.442695
        %v1304 = vpow.pop %v1303
        %v1305 = vmul.f32 %v1185, 1.442695
        %v1306 = vpow.pop %v1305
        %v1307 = vmul.f32 %v1186, 1.442695
        %v1308 = vpow.pop %v1307
        %v1309 = vmul.f32 %v1187, 1.442695
        %v1310 = vpow.pop %v1309
        %v1311 = vmul.f32 %v1188, 1.442695
        %v1312 = vpow.pop %v1311
        %v1313 = vmul.f32 %v1189, 1.442695
        %v1314 = vpow.pop %v1313
        %v1315 = vmul.f32 %v1190, 1.442695
        %v1316 = vpow.pop %v1315
        %v1317 = vmul.f32 %v1191, 1.442695
        %v1318 = vpow.pop %v1317
        %v1319 = vmul.f32 %v1192, 1.442695
        %v1320 = vpow.pop %v1319
        %v1321 = vpack.c.bf16 %v1198, %v1194
        %v1322 = vpack.c.bf16 %v1200, %v1196
        %v1323 = vpack.c.bf16 %v1206, %v1202
        %v1324 = vpack.c.bf16 %v1208, %v1204
        %v1325 = vpack.c.bf16 %v1214, %v1210
        %v1326 = vpack.c.bf16 %v1216, %v1212
        %v1327 = vpack.c.bf16 %v1222, %v1218
        %v1328 = vpack.c.bf16 %v1224, %v1220
        %v1329 = vpack.c.bf16 %v1230, %v1226
        %v1330 = vpack.c.bf16 %v1232, %v1228
        %v1331 = vpack.c.bf16 %v1238, %v1234
        %v1332 = vpack.c.bf16 %v1240, %v1236
        %v1333 = vpack.c.bf16 %v1246, %v1242
        %v1334 = vpack.c.bf16 %v1248, %v1244
        %v1335 = vpack.c.bf16 %v1254, %v1250
        %v1336 = vpack.c.bf16 %v1256, %v1252
        %v1337 = vpack.c.bf16 %v1262, %v1258
        %v1338 = vpack.c.bf16 %v1264, %v1260
        %v1339 = vpack.c.bf16 %v1270, %v1266
        %v1340 = vpack.c.bf16 %v1272, %v1268
        %v1341 = vpack.c.bf16 %v1278, %v1274
        %v1342 = vpack.c.bf16 %v1280, %v1276
        %v1343 = vpack.c.bf16 %v1286, %v1282
        %v1344 = vpack.c.bf16 %v1288, %v1284
        %v1345 = vpack.c.bf16 %v1294, %v1290
        %v1346 = vpack.c.bf16 %v1296, %v1292
        %v1347 = vpack.c.bf16 %v1302, %v1298
        %v1348 = vpack.c.bf16 %v1304, %v1300
        %v1349 = vpack.c.bf16 %v1310, %v1306
        %v1350 = vpack.c.bf16 %v1312, %v1308
        %v1351 = vpack.c.bf16 %v1318, %v1314
        %v1352 = vpack.c.bf16 %v1320, %v1316
        %v1353 = vpack.c.bf16 %v597, %v597
        %v1354 = vpack.c.bf16 %v599, %v599
        %1355 = vmatprep.subr.bf16.mxu0 %v1322
        %1356 = vmatpush1.bf16.msra.mxu0 %v1321
        %1357 = vmatprep.subr.bf16.mxu0 %v1324
        %1358 = vmatpush1.bf16.msra.mxu0 %v1323
        %1359 = vmatprep.subr.bf16.mxu0 %v1326
        %1360 = vmatpush1.bf16.msra.mxu0 %v1325
        %1361 = vmatprep.subr.bf16.mxu0 %v1328
        %1362 = vmatpush1.bf16.msra.mxu0 %v1327
        %1363 = vmatprep.subr.bf16.mxu0 %v1330
        %1364 = vmatpush1.bf16.msra.mxu0 %v1329
        %1365 = vmatprep.subr.bf16.mxu0 %v1332
        %1366 = vmatpush1.bf16.msra.mxu0 %v1331
        %1367 = vmatprep.subr.bf16.mxu0 %v1334
        %1368 = vmatpush1.bf16.msra.mxu0 %v1333
        %1369 = vmatprep.subr.bf16.mxu0 %v1336
        %1370 = vmatpush1.bf16.msra.mxu0 %v1335
        %1371 = vmatprep.subr.bf16.mxu0 %v1338
        %1372 = vmatpush1.bf16.msra.mxu0 %v1337
        %1373 = vmatprep.subr.bf16.mxu0 %v1340
        %1374 = vmatpush1.bf16.msra.mxu0 %v1339
        %1375 = vmatprep.subr.bf16.mxu0 %v1342
        %1376 = vmatpush1.bf16.msra.mxu0 %v1341
        %1377 = vmatprep.subr.bf16.mxu0 %v1344
        %1378 = vmatpush1.bf16.msra.mxu0 %v1343
        %1379 = vmatprep.subr.bf16.mxu0 %v1346
        %1380 = vmatpush1.bf16.msra.mxu0 %v1345
        %1381 = vmatprep.subr.bf16.mxu0 %v1348
        %1382 = vmatpush1.bf16.msra.mxu0 %v1347
        %1383 = vmatprep.subr.bf16.mxu0 %v1350
        %1384 = vmatpush1.bf16.msra.mxu0 %v1349
        %1385 = vmatprep.subr.bf16.mxu0 %v1352
        %1386 = vmatpush1.bf16.msra.mxu0 %v1351
        %1387 = vmatprep.mubr.bf16.mxu0 %v1354
        %1388 = vmatmul.mubr.bf16.gmra.mrb[0].mxu0 %v1353
        %v1389 = vpop.f32.mrb[0].mxu0
        %v1390 = vadd.f32 0.0, %v1389
        %v1391 = vpop.f32.mrb[0].mxu0
        %v1392 = vadd.f32 0.0, %v1391
        %v1393 = vpop.f32.mrb[0].mxu0
        %v1394 = vpop.f32.mrb[0].mxu0
        %1395 = vdwg.mxu0
        %v1396 = vld [vmem:[#allocation4] sm:$0xff]
        %v1397 = vld [vmem:[#allocation4 + $0x8] sm:$0xff]
        %v1399 = vlaneseq
        %v1400 = vshrl.u32 %v1399, 7
        %v1401 = vsub.s32 0, %v1400
        %v1402 = vrot.slane %v1117, %v1401
        %v1403 = vlaneseq
        %v1404 = vshrl.u32 %v1403, 7
        %v1405 = vsub.s32 1, %v1404
        %v1406 = vrot.slane %v1117, %v1405
        %v1409 = vmul.f32 %v1402, %v1396
        %v1410 = vmul.f32 %v1406, %v1397
        %v1411 = vadd.f32 %v1409, %v1390
        %v1412 = vadd.f32 %v1410, %v1392
        %1413 = vst [vmem:[#allocation4] sm:$0xff] %v1411
        %1414 = vst [vmem:[#allocation4 + $0x8] sm:$0xff] %v1412
        %v1415 = vlaneseq
        %vm1416 = vcmp.ge.s32.totalorder %v1415, 0
        %vm1417 = vcmp.lt.s32.totalorder %v1415, 256
        %vm1418 = vmand %vm1416, %vm1417
        %1419 = vst.msk [vmem:[#allocation3] sm:$0x3] %vm1418, %v1114
        // Predicated region
        $region73: #{cross_attention_block.1} parent=43 // pred_check
          %p1420 = pneg %p392
        $region74: #{cross_attention_block.1} parent=43 // pred_check_branch
          %1422 = sbr.rel (%p1420) target = $region76
        $region75: #{cross_attention_block.1} parent=43 // pred_region
          %v1423 = vld [vmem:[#allocation4] sm:$0xff]
          %v1424 = vld [vmem:[#allocation4 + $0x8] sm:$0xff]
          %v1425 = vrcp.pop %v1423
          %v1426 = vrcp.pop %v1424
          %v1427 = vlaneseq
          %v1428 = vshrl.u32 %v1427, 7
          %v1429 = vsub.s32 4, %v1428
          %v1430 = vrot.slane %v1425, %v1429
          %v1431 = vlaneseq
          %v1432 = vshrl.u32 %v1431, 7
          %v1433 = vsub.s32 4, %v1432
          %v1434 = vrot.slane %v1426, %v1433
          %v1435 = vmul.f32 %v1423, %v1430
          %v1436 = vmul.f32 %v1424, %v1434
          %v1439 = vcombine.low %v1435, %v1436
          %1441 = vst [vmem:[%s388] sm:$0xff] %v1439
        $region76: #{cross_attention_block.1} parent=43 // pred_fallthru
          _
        %s1442 = sand.u32 %s197, 1
        %s1443 = scalar_lea.sflag [#allocation7], %s1442
        %s1444 = sand.u32 %s197, 1
        %s1445 = smul.addr %s1444, 8
        %s1446 = scalar_lea.vmem [#allocation16], %s1445
        // Predicated region
        $region77: #{cross_attention_block.1} parent=43 // pred_check
          %p1447 = pneg %p207
        $region78: #{cross_attention_block.1} parent=43 // pred_check_branch
          %1449 = sbr.rel (%p1447) target = $region80
        $region79: #{cross_attention_block.1} parent=43 // pred_region
          %s1450 = smul.u32 2, %s34
          %s1452 = ssub.s32 128, 128
          %1453 = vsyncadd %s1443, %s1452
          %s1454 = smul.addr %s33, 2
          %s1455 = sadd.s32 %s1450, %s1454
          %s1456 = smul.addr %s1455, 64
          %s1457 = scalar_lea.hbm %s6, %s1456
          %s1459 = sshll.u32 %s1446, 4
          %s1460 = int_to_ptr.vmem [resolvable:$true] %s1459
          %1462 = dma.vmem_to_hbm [thread:$0]  %s1460, 128, %s1457, %s1443
        $region80: #{cross_attention_block.1} parent=43 // pred_fallthru
          _
      $region44: #{cross_attention_block.1} parent=5 // pred_fallthru
        _
      %p1463 = scmp.le.s32.totalorder 2, %s23
      // Predicated region
      $region81: #{cross_attention_block.1} parent=5 // pred_check
        %p1464 = pneg %p1463
      $region82: #{cross_attention_block.1} parent=5 // pred_check_branch
        %1466 = sbr.rel (%p1464) target = $region84
      $region83: #{cross_attention_block.1} parent=5 // pred_region
        %s1467 = ssub.s32 %s23, 2
        // Predicated region
        $region85: #{cross_attention_block.1} parent=83 // pred_check
          %p1468 = pneg %p213
        $region86: #{cross_attention_block.1} parent=83 // pred_check_branch
          %1470 = sbr.rel (%p1468) target = $region88
        $region87: #{cross_attention_block.1} parent=83 // pred_region
          %s1471 = sand.u32 %s198, 1
          %s1472 = scalar_lea.sflag [#allocation7], %s1471
          %s1473 = sand.u32 %s198, 1
          %s1474 = smul.addr %s1473, 8
          %s1475 = scalar_lea.vmem [#allocation16], %s1474
          %1476 = dma.done %s1472, 128
        $region88: #{cross_attention_block.1} parent=83 // pred_fallthru
          _
      $region84: #{cross_attention_block.1} parent=5 // pred_fallthru
        _
    $region6: #{cross_attention_block.1} parent=1 // loop_footer
      %s27 = sadd.s32 1, %s23
    $region7: #{cross_attention_block.1} parent=1 // loop_footer_branch
      %22 = sbr.rel target = $region3
    $region8: #{cross_attention_block.1} parent=1 // loop_exit
      _
    %1477 = vsyncpa [#allocation6], 1
    %s1478 = scalar_lea.sflag [#allocation6], 1
    %1479 = vsyncpa %s1478, 1
    %1480 = vsyncpa [#allocation9], 1
    %s1481 = scalar_lea.sflag [#allocation9], 1
    %1482 = vsyncpa %s1481, 1
    %1483 = vsyncpa [#allocation12], 1
    %1484 = vsyncpa [#allocation15], 1
    %1485 = vsyncpa [#allocation7], 1
    %s1486 = scalar_lea.sflag [#allocation7], 1
    %1487 = vsyncpa %s1486, 1

</llo_original>
